<compile_context>
chip_gen: v6e
topology: v6e:2x2x1
jax: 0.10.0
libtpu: 0.0.40
codegen_flags: <defaults>
</compile_context>

<pallas_src>
import functools

import jax
import jax.numpy as jnp
from jax.experimental import pallas as pl
from jax.experimental.pallas import tpu as pltpu


def _round_up(n, m):
    return ((n + m - 1) // m) * m


# ---------------------------------------------------------------------------
# IF-neuron update (snntorch.Leaky, reset_mechanism="subtract"):
#   reset = (mem_prev > threshold)
#   mem   = beta*mem_prev + input - reset*threshold
#   spk   = (mem > threshold)
# Shared by the Pallas kernel and the pure-JAX reference (identical math).
# ---------------------------------------------------------------------------
def _if_update(cur, mem_prev, beta, threshold):
    rst = (mem_prev > threshold).astype(jnp.float32)
    if beta != 0.0:
        mem = beta * mem_prev + cur - rst * threshold
    else:
        mem = cur - rst * threshold
    spk = (mem > threshold).astype(jnp.float32)
    return spk, mem


# ---------------------------------------------------------------------------
# Pallas kernel: one time step of the SNN for one batch tile.
#   grid = (batch_tiles [parallel], steps [arbitrary / sequential])
# Membrane potentials live in VMEM scratch and persist across the time axis.
# ---------------------------------------------------------------------------
def conv_snn_kernel(s_ref, w1_ref, w2_ref, w3_ref,
                    spk_out_ref, mem_out_ref,
                    mem_in_ref, mem_h1_ref, mem_h2_ref,
                    *, beta, threshold):
    t = pl.program_id(1)

    @pl.when(t == 0)
    def _():
        mem_in_ref[...] = jnp.zeros_like(mem_in_ref)
        mem_h1_ref[...] = jnp.zeros_like(mem_h1_ref)
        mem_h2_ref[...] = jnp.zeros_like(mem_h2_ref)

    # layer 1: Conv2d + AvgPool2d folded into one dense matmul, then IF.
    cur = jnp.dot(s_ref[...], w1_ref[...], preferred_element_type=jnp.float32)
    spk_in, mem_in = _if_update(cur, mem_in_ref[...], beta, threshold)
    mem_in_ref[...] = mem_in

    # layer 2: Conv2d + AvgPool2d folded into one dense matmul, then IF.
    cur = jnp.dot(spk_in.astype(w2_ref.dtype), w2_ref[...],
                  preferred_element_type=jnp.float32)
    spk_h1, mem_h1 = _if_update(cur, mem_h1_ref[...], beta, threshold)
    mem_h1_ref[...] = mem_h1

    # layer 3: bias-free Linear, then IF.
    cur = jnp.dot(spk_h1.astype(w3_ref.dtype), w3_ref[...],
                  preferred_element_type=jnp.float32)
    spk_h2, mem_h2 = _if_update(cur, mem_h2_ref[...], beta, threshold)
    mem_h2_ref[...] = mem_h2

    spk_out_ref[...] = spk_h2.astype(spk_out_ref.dtype)
    mem_out_ref[...] = mem_h2.astype(mem_out_ref.dtype)


# ---------------------------------------------------------------------------
# Wrapper-side helpers (one-time weight transformation + spike encoding)
# ---------------------------------------------------------------------------
def poisson_spikes(key, data, steps, max_rate):
    """JAX translation of to_poisson_spikes (torch.rand -> jax.random)."""
    rescale = max_rate / steps
    rand = jax.random.uniform(key, (steps, *data.shape), dtype=jnp.float32)
    return (rand < data * rescale).astype(jnp.float32)


def conv_pool_as_matrix(conv_w, in_shape):
    """Fold Conv2d(bias=False, stride 1, VALID) + AvgPool2d(2) into a dense
    (Cin*H*W, Cout*Hp*Wp) matrix by pushing an identity basis through it.
    conv_w is torch-layout (Cout, Cin, K, K)."""
    cin, h, w = in_shape
    n_in = cin * h * w
    basis = jnp.eye(n_in, dtype=jnp.float32).reshape(n_in, cin, h, w)
    out = jax.lax.conv_general_dilated(
        basis, conv_w.astype(jnp.float32), window_strides=(1, 1),
        padding='VALID', dimension_numbers=('NCHW', 'OIHW', 'NCHW'))
    n, co, ho, wo = out.shape
    hp, wp = ho // 2, wo // 2                       # AvgPool2d(2), floor mode
    out = out[:, :, :hp * 2, :wp * 2].reshape(n, co, hp, 2, wp, 2).mean(axis=(3, 5))
    return out.reshape(n_in, co * hp * wp)          # NCHW-flattened features


def prepare_params(conv1_w, conv2_w, fc_w, in_shape):
    """Torch-layout weights -> padded, lane-dense bf16 dense matrices.
    conv1_w: (h0, Cin, K, K); conv2_w: (h1, h0, K, K); fc_w: (n_out, n_in)."""
    cin, h, w = in_shape
    k = conv1_w.shape[-1]
    h0 = conv1_w.shape[0]
    p1h, p1w = (h - k + 1) // 2, (w - k + 1) // 2   # spatial after conv1+pool

    w1 = conv_pool_as_matrix(conv1_w, (cin, h, w))
    w2 = conv_pool_as_matrix(conv2_w, (h0, p1h, p1w))
    w3 = fc_w.astype(jnp.float32).T                 # (n_in, n_out) for x @ W
    assert w2.shape[1] == w3.shape[0], "n_y[0] must equal h1 * pooled spatial"

    dims = dict(n_in=w1.shape[0], n_f1=w1.shape[1],
                n_f2=w2.shape[1], n_out=w3.shape[1])
    pdims = {kk: _round_up(v, 128) for kk, v in dims.items()}

    def pad2(a, r, c):
        return jnp.pad(a, ((0, r - a.shape[0]), (0, c - a.shape[1])))

    return dict(
        w1=pad2(w1, pdims['n_in'], pdims['n_f1']).astype(jnp.bfloat16),
        w2=pad2(w2, pdims['n_f1'], pdims['n_f2']).astype(jnp.bfloat16),
        w3=pad2(w3, pdims['n_f2'], pdims['n_out']).astype(jnp.bfloat16),
        dims=dims, pdims=pdims)


def conv_snn_forward(spikes, params, *, beta=0.0, threshold=1.0):
    """Per-step SNN loop over an encoded spike train.
    spikes: (steps, B, C, H, W) float {0,1}.
    Returns (out_spikes, memh2_mem), each (steps, B, n_out), matching
    Conv_SNN.forward's (torch.stack(out_spikes), torch.stack(memh2_mem))."""
    dims, pdims = params['dims'], params['pdims']
    steps, B = spikes.shape[0], spikes.shape[1]
    n_in, n_out = dims['n_in'], dims['n_out']

    s = spikes.reshape(steps, B, n_in)                # NCHW flatten, like torch
    tb = min(_round_up(B, 8), 128)                    # sublane-aligned batch tile
    b_pad = _round_up(B, tb)
    s = jnp.pad(s, ((0, 0), (0, b_pad - B), (0, pdims['n_in'] - n_in)))
    s = s.astype(jnp.bfloat16)                        # 0/1 spikes: exact in bf16
    n_bt = b_pad // tb

    w1, w2, w3 = params['w1'], params['w2'], params['w3']

    flops = 2 * steps * b_pad * (pdims['n_in'] * pdims['n_f1'] +
                                 pdims['n_f1'] * pdims['n_f2'] +
                                 pdims['n_f2'] * pdims['n_out'])
    bytes_accessed = sum(int(a.size) * a.dtype.itemsize for a in (s, w1, w2, w3))
    bytes_accessed += 2 * steps * b_pad * pdims['n_out'] * 4

    kern = functools.partial(conv_snn_kernel, beta=beta, threshold=threshold)
    out_sds = jax.ShapeDtypeStruct((steps, b_pad, pdims['n_out']), jnp.float32)

    spk, mem = pl.pallas_call(
        kern,
        out_shape=(out_sds, out_sds),
        grid_spec=pltpu.PrefetchScalarGridSpec(
            num_scalar_prefetch=0,
            grid=(n_bt, steps),
            in_specs=[
                # one spike frame per (batch tile, step) streams in
                pl.BlockSpec((pl.Squeezed(), tb, pdims['n_in']),
                             lambda b, t: (t, b, 0)),
                # weights: constant index_map -> DMA'd once, VMEM-resident
                pl.BlockSpec((pdims['n_in'], pdims['n_f1']), lambda b, t: (0, 0)),
                pl.BlockSpec((pdims['n_f1'], pdims['n_f2']), lambda b, t: (0, 0)),
                pl.BlockSpec((pdims['n_f2'], pdims['n_out']), lambda b, t: (0, 0)),
            ],
            out_specs=[
                pl.BlockSpec((pl.Squeezed(), tb, pdims['n_out']),
                             lambda b, t: (t, b, 0)),
                pl.BlockSpec((pl.Squeezed(), tb, pdims['n_out']),
                             lambda b, t: (t, b, 0)),
            ],
            scratch_shapes=[
                pltpu.VMEM((tb, pdims['n_f1']), jnp.float32),   # membrane, layer 1
                pltpu.VMEM((tb, pdims['n_f2']), jnp.float32),   # membrane, layer 2
                pltpu.VMEM((tb, pdims['n_out']), jnp.float32),  # membrane, fc layer
            ]),
        compiler_params=pltpu.CompilerParams(
            dimension_semantics=("parallel", "arbitrary")),
        cost_estimate=pl.CostEstimate(flops=int(flops), transcendentals=0,
                                      bytes_accessed=int(bytes_accessed)),
    )(s, w1, w2, w3)

    return spk[:, :B, :n_out], mem[:, :B, :n_out]


# ---------------------------------------------------------------------------
# Pure-JAX (non-Pallas) reference with identical math, for correctness check.
# ---------------------------------------------------------------------------
def conv_snn_reference(spikes, params, *, beta=0.0, threshold=1.0):
    dims, pdims = params['dims'], params['pdims']
    steps, B = spikes.shape[0], spikes.shape[1]
    s = spikes.reshape(steps, B, dims['n_in'])
    s = jnp.pad(s, ((0, 0), (0, 0), (0, pdims['n_in'] - dims['n_in'])))
    s = s.astype(jnp.bfloat16)
    w1, w2, w3 = params['w1'], params['w2'], params['w3']

    mem_in = jnp.zeros((B, pdims['n_f1']), jnp.float32)
    mem_h1 = jnp.zeros((B, pdims['n_f2']), jnp.float32)
    mem_h2 = jnp.zeros((B, pdims['n_out']), jnp.float32)
    spk_out, mem_out = [], []
    for t in range(steps):
        cur = jnp.dot(s[t], w1, preferred_element_type=jnp.float32)
        spk_in, mem_in = _if_update(cur, mem_in, beta, threshold)
        cur = jnp.dot(spk_in.astype(w2.dtype), w2, preferred_element_type=jnp.float32)
        spk_h1, mem_h1 = _if_update(cur, mem_h1, beta, threshold)
        cur = jnp.dot(spk_h1.astype(w3.dtype), w3, preferred_element_type=jnp.float32)
        spk_h2, mem_h2 = _if_update(cur, mem_h2, beta, threshold)
        spk_out.append(spk_h2)
        mem_out.append(mem_h2)
    spk_out = jnp.stack(spk_out)[:, :, :dims['n_out']]
    mem_out = jnp.stack(mem_out)[:, :, :dims['n_out']]
    return spk_out, mem_out


if __name__ == "__main__":
    key = jax.random.PRNGKey(0)
    k_x, k_c1, k_c2, k_fc, k_spk = jax.random.split(key, 5)

    # Conv_SNN(n_x=4, n_h=[8, 16], n_y=[16, 10], kernel_size=5, beta=0,
    #          threshold=1, steps=8, rate=16); input (B=2, 4, 16, 16) in [0,1].
    B, C, H, W = 2, 4, 16, 16
    n_h = [8, 16]
    n_y = [16, 10]
    K = 5
    steps, rate = 8, 16
    beta, threshold = 0.0, 1.0

    x = jax.random.uniform(k_x, (B, C, H, W), jnp.float32)

    # torch-layout weights (Conv2d: (out, in, K, K); Linear: (out, in)),
    # U(-1/sqrt(fan_in), 1/sqrt(fan_in)) like torch's default init.
    def u(k, shape, fan_in):
        bnd = 1.0 / (fan_in ** 0.5)
        return jax.random.uniform(k, shape, jnp.float32, minval=-bnd, maxval=bnd)

    conv1_w = u(k_c1, (n_h[0], C, K, K), C * K * K)
    conv2_w = u(k_c2, (n_h[1], n_h[0], K, K), n_h[0] * K * K)
    fc_w = u(k_fc, (n_y[1], n_y[0]), n_y[0])

    params = prepare_params(conv1_w, conv2_w, fc_w, (C, H, W))
    spikes = poisson_spikes(k_spk, x, steps, rate)          # (steps, B, C, H, W)

    spk, mem = conv_snn_forward(spikes, params, beta=beta, threshold=threshold)
    spk, mem = jax.block_until_ready((spk, mem))

    spk_ref, mem_ref = conv_snn_reference(spikes, params, beta=beta,
                                          threshold=threshold)

    assert spk.shape == (steps, B, n_y[1]) and mem.shape == (steps, B, n_y[1])
    assert jnp.array_equal(spk, spk_ref), "output spike mismatch"
    assert jnp.allclose(mem, mem_ref, atol=1e-4, rtol=1e-4), "membrane mismatch"

    print("KERNEL_OK")
</pallas_src>

<mosaic_0001>
module attributes {stable_mosaic.version = 11 : i64} {
  func.func @conv_snn_kernel(%arg0: i32, %arg1: i32, %arg2: memref<1x8x1024xbf16, #tpu.memory_space<vmem>>, %arg3: memref<1024x384xbf16, #tpu.memory_space<vmem>>, %arg4: memref<384x128xbf16, #tpu.memory_space<vmem>>, %arg5: memref<128x128xbf16, #tpu.memory_space<vmem>>, %arg6: memref<1x8x128xf32, #tpu.memory_space<vmem>>, %arg7: memref<1x8x128xf32, #tpu.memory_space<vmem>>, %arg8: memref<8x384xf32, #tpu.memory_space<vmem>>, %arg9: memref<8x128xf32, #tpu.memory_space<vmem>>, %arg10: memref<8x128xf32, #tpu.memory_space<vmem>>) attributes {dimension_semantics = [#tpu.dimension_semantics<parallel>, #tpu.dimension_semantics<arbitrary>], iteration_bounds = array<i64: 1, 8>, scalar_prefetch = 0 : i64, scratch_operands = 3 : i64, tpu.core_type = #tpu.core_type<tc>, window_params = [{transform_indices = @transform_0, window_bounds = array<i64: 1, 8, 1024>}, {pipeline_mode = #tpu.pipeline_mode<synchronous>, transform_indices = @transform_1, window_bounds = array<i64: 1024, 384>}, {pipeline_mode = #tpu.pipeline_mode<synchronous>, transform_indices = @transform_2, window_bounds = array<i64: 384, 128>}, {pipeline_mode = #tpu.pipeline_mode<synchronous>, transform_indices = @transform_3, window_bounds = array<i64: 128, 128>}, {transform_indices = @transform_4, window_bounds = array<i64: 1, 8, 128>}, {transform_indices = @transform_5, window_bounds = array<i64: 1, 8, 128>}]} {
    %c0_i32 = arith.constant 0 : i32
    %0 = arith.cmpi eq, %arg1, %c0_i32 : i32
    %1 = arith.extui %0 : i1 to i32
    %c0_i32_0 = arith.constant 0 : i32
    %2 = arith.cmpi ne, %1, %c0_i32_0 : i32
    scf.if %2 {
      %cst_38 = arith.constant 0.000000e+00 : f32
      %58 = vector.broadcast %cst_38 : f32 to vector<8x384xf32>
      %c0_39 = arith.constant 0 : index
      %c0_40 = arith.constant 0 : index
      %59 = vector.load %arg8[%c0_39, %c0_40] : memref<8x384xf32, #tpu.memory_space<vmem>>, vector<8x384xf32>
      tpu.vector_store %arg8[%c0_39, %c0_40], %58 {strides = array<i32>} : memref<8x384xf32, #tpu.memory_space<vmem>>, vector<8x384xf32>,
      %cst_41 = arith.constant 0.000000e+00 : f32
      %60 = vector.broadcast %cst_41 : f32 to vector<8x128xf32>
      %c0_42 = arith.constant 0 : index
      %c0_43 = arith.constant 0 : index
      %61 = vector.load %arg9[%c0_42, %c0_43] : memref<8x128xf32, #tpu.memory_space<vmem>>, vector<8x128xf32>
      tpu.vector_store %arg9[%c0_42, %c0_43], %60 {strides = array<i32>} : memref<8x128xf32, #tpu.memory_space<vmem>>, vector<8x128xf32>,
      %cst_44 = arith.constant 0.000000e+00 : f32
      %62 = vector.broadcast %cst_44 : f32 to vector<8x128xf32>
      %c0_45 = arith.constant 0 : index
      %c0_46 = arith.constant 0 : index
      %63 = vector.load %arg10[%c0_45, %c0_46] : memref<8x128xf32, #tpu.memory_space<vmem>>, vector<8x128xf32>
      tpu.vector_store %arg10[%c0_45, %c0_46], %62 {strides = array<i32>} : memref<8x128xf32, #tpu.memory_space<vmem>>, vector<8x128xf32>,
    } else {
    }
    %c0 = arith.constant 0 : index
    %c0_1 = arith.constant 0 : index
    %c0_2 = arith.constant 0 : index
    %3 = vector.load %arg2[%c0, %c0_1, %c0_2] : memref<1x8x1024xbf16, #tpu.memory_space<vmem>>, vector<1x8x1024xbf16>
    %4 = vector.shape_cast %3 : vector<1x8x1024xbf16> to vector<8x1024xbf16>
    %c0_3 = arith.constant 0 : index
    %c0_4 = arith.constant 0 : index
    %5 = vector.load %arg3[%c0_3, %c0_4] : memref<1024x384xbf16, #tpu.memory_space<vmem>>, vector<1024x384xbf16>
    %cst = arith.constant dense<0.000000e+00> : vector<8x384xf32>
    %6 = tpu.matmul %4, %5, %cst {dimension_numbers = #tpu.dot_dimension_numbers<[1], [0], [0], [1], [0, 0, 1, 1], [], []>} : vector<8x1024xbf16>, vector<1024x384xbf16>, vector<8x384xf32> -> vector<8x384xf32>
    %c0_5 = arith.constant 0 : index
    %c0_6 = arith.constant 0 : index
    %7 = vector.load %arg8[%c0_5, %c0_6] : memref<8x384xf32, #tpu.memory_space<vmem>>, vector<8x384xf32>
    %cst_7 = arith.constant 1.000000e+00 : f32
    %8 = vector.broadcast %cst_7 : f32 to vector<8x384xf32>
    %9 = arith.cmpf ogt, %7, %8 : vector<8x384xf32>
    %10 = arith.extui %9 : vector<8x384xi1> to vector<8x384xi32>
    %11 = arith.sitofp %10 : vector<8x384xi32> to vector<8x384xf32>
    %cst_8 = arith.constant 1.000000e+00 : f32
    %12 = vector.broadcast %cst_8 : f32 to vector<8x384xf32>
    %13 = arith.mulf %11, %12 : vector<8x384xf32>
    %14 = arith.subf %6, %13 : vector<8x384xf32>
    %cst_9 = arith.constant 1.000000e+00 : f32
    %15 = vector.broadcast %cst_9 : f32 to vector<8x384xf32>
    %16 = arith.cmpf ogt, %14, %15 : vector<8x384xf32>
    %17 = arith.extui %16 : vector<8x384xi1> to vector<8x384xi32>
    %18 = arith.sitofp %17 : vector<8x384xi32> to vector<8x384xf32>
    %c0_10 = arith.constant 0 : index
    %c0_11 = arith.constant 0 : index
    %19 = vector.load %arg8[%c0_10, %c0_11] : memref<8x384xf32, #tpu.memory_space<vmem>>, vector<8x384xf32>
    tpu.vector_store %arg8[%c0_10, %c0_11], %14 {strides = array<i32>} : memref<8x384xf32, #tpu.memory_space<vmem>>, vector<8x384xf32>,
    %20 = arith.truncf %18 : vector<8x384xf32> to vector<8x384xbf16>
    %c0_12 = arith.constant 0 : index
    %c0_13 = arith.constant 0 : index
    %21 = vector.load %arg4[%c0_12, %c0_13] : memref<384x128xbf16, #tpu.memory_space<vmem>>, vector<384x128xbf16>
    %cst_14 = arith.constant dense<0.000000e+00> : vector<8x128xf32>
    %22 = tpu.matmul %20, %21, %cst_14 {dimension_numbers = #tpu.dot_dimension_numbers<[1], [0], [0], [1], [0, 0, 1, 1], [], []>} : vector<8x384xbf16>, vector<384x128xbf16>, vector<8x128xf32> -> vector<8x128xf32>
    %c0_15 = arith.constant 0 : index
    %c0_16 = arith.constant 0 : index
    %23 = vector.load %arg9[%c0_15, %c0_16] : memref<8x128xf32, #tpu.memory_space<vmem>>, vector<8x128xf32>
    %cst_17 = arith.constant 1.000000e+00 : f32
    %24 = vector.broadcast %cst_17 : f32 to vector<8x128xf32>
    %25 = arith.cmpf ogt, %23, %24 : vector<8x128xf32>
    %26 = arith.extui %25 : vector<8x128xi1> to vector<8x128xi32>
    %27 = arith.sitofp %26 : vector<8x128xi32> to vector<8x128xf32>
    %cst_18 = arith.constant 1.000000e+00 : f32
    %28 = vector.broadcast %cst_18 : f32 to vector<8x128xf32>
    %29 = arith.mulf %27, %28 : vector<8x128xf32>
    %30 = arith.subf %22, %29 : vector<8x128xf32>
    %cst_19 = arith.constant 1.000000e+00 : f32
    %31 = vector.broadcast %cst_19 : f32 to vector<8x128xf32>
    %32 = arith.cmpf ogt, %30, %31 : vector<8x128xf32>
    %33 = arith.extui %32 : vector<8x128xi1> to vector<8x128xi32>
    %34 = arith.sitofp %33 : vector<8x128xi32> to vector<8x128xf32>
    %c0_20 = arith.constant 0 : index
    %c0_21 = arith.constant 0 : index
    %35 = vector.load %arg9[%c0_20, %c0_21] : memref<8x128xf32, #tpu.memory_space<vmem>>, vector<8x128xf32>
    tpu.vector_store %arg9[%c0_20, %c0_21], %30 {strides = array<i32>} : memref<8x128xf32, #tpu.memory_space<vmem>>, vector<8x128xf32>,
    %36 = arith.truncf %34 : vector<8x128xf32> to vector<8x128xbf16>
    %c0_22 = arith.constant 0 : index
    %c0_23 = arith.constant 0 : index
    %37 = vector.load %arg5[%c0_22, %c0_23] : memref<128x128xbf16, #tpu.memory_space<vmem>>, vector<128x128xbf16>
    %cst_24 = arith.constant dense<0.000000e+00> : vector<8x128xf32>
    %38 = tpu.matmul %36, %37, %cst_24 {dimension_numbers = #tpu.dot_dimension_numbers<[1], [0], [0], [1], [0, 0, 1, 1], [], []>} : vector<8x128xbf16>, vector<128x128xbf16>, vector<8x128xf32> -> vector<8x128xf32>
    %c0_25 = arith.constant 0 : index
    %c0_26 = arith.constant 0 : index
    %39 = vector.load %arg10[%c0_25, %c0_26] : memref<8x128xf32, #tpu.memory_space<vmem>>, vector<8x128xf32>
    %cst_27 = arith.constant 1.000000e+00 : f32
    %40 = vector.broadcast %cst_27 : f32 to vector<8x128xf32>
    %41 = arith.cmpf ogt, %39, %40 : vector<8x128xf32>
    %42 = arith.extui %41 : vector<8x128xi1> to vector<8x128xi32>
    %43 = arith.sitofp %42 : vector<8x128xi32> to vector<8x128xf32>
    %cst_28 = arith.constant 1.000000e+00 : f32
    %44 = vector.broadcast %cst_28 : f32 to vector<8x128xf32>
    %45 = arith.mulf %43, %44 : vector<8x128xf32>
    %46 = arith.subf %38, %45 : vector<8x128xf32>
    %cst_29 = arith.constant 1.000000e+00 : f32
    %47 = vector.broadcast %cst_29 : f32 to vector<8x128xf32>
    %48 = arith.cmpf ogt, %46, %47 : vector<8x128xf32>
    %49 = arith.extui %48 : vector<8x128xi1> to vector<8x128xi32>
    %50 = arith.sitofp %49 : vector<8x128xi32> to vector<8x128xf32>
    %c0_30 = arith.constant 0 : index
    %c0_31 = arith.constant 0 : index
    %51 = vector.load %arg10[%c0_30, %c0_31] : memref<8x128xf32, #tpu.memory_space<vmem>>, vector<8x128xf32>
    tpu.vector_store %arg10[%c0_30, %c0_31], %46 {strides = array<i32>} : memref<8x128xf32, #tpu.memory_space<vmem>>, vector<8x128xf32>,
    %c0_32 = arith.constant 0 : index
    %c0_33 = arith.constant 0 : index
    %c0_34 = arith.constant 0 : index
    %52 = vector.load %arg6[%c0_32, %c0_33, %c0_34] : memref<1x8x128xf32, #tpu.memory_space<vmem>>, vector<1x8x128xf32>
    %53 = vector.shape_cast %52 : vector<1x8x128xf32> to vector<8x128xf32>
    %54 = vector.shape_cast %50 : vector<8x128xf32> to vector<1x8x128xf32>
    tpu.vector_store %arg6[%c0_32, %c0_33, %c0_34], %54 {strides = array<i32>} : memref<1x8x128xf32, #tpu.memory_space<vmem>>, vector<1x8x128xf32>,
    %c0_35 = arith.constant 0 : index
    %c0_36 = arith.constant 0 : index
    %c0_37 = arith.constant 0 : index
    %55 = vector.load %arg7[%c0_35, %c0_36, %c0_37] : memref<1x8x128xf32, #tpu.memory_space<vmem>>, vector<1x8x128xf32>
    %56 = vector.shape_cast %55 : vector<1x8x128xf32> to vector<8x128xf32>
    %57 = vector.shape_cast %46 : vector<8x128xf32> to vector<1x8x128xf32>
    tpu.vector_store %arg7[%c0_35, %c0_36, %c0_37], %57 {strides = array<i32>} : memref<1x8x128xf32, #tpu.memory_space<vmem>>, vector<1x8x128xf32>,
    return
  }
  func.func @transform_0(%arg0: i32, %arg1: i32) -> (i32, i32, i32) {
    %c0_i32 = arith.constant 0 : i32
    %c0_i32_0 = arith.constant 0 : i32
    return %arg1, %arg0, %c0_i32 : i32, i32, i32
  }
  func.func @transform_1(%arg0: i32, %arg1: i32) -> (i32, i32) {
    %c0_i32 = arith.constant 0 : i32
    %c0_i32_0 = arith.constant 0 : i32
    %c0_i32_1 = arith.constant 0 : i32
    return %c0_i32, %c0_i32_0 : i32, i32
  }
  func.func @transform_2(%arg0: i32, %arg1: i32) -> (i32, i32) {
    %c0_i32 = arith.constant 0 : i32
    %c0_i32_0 = arith.constant 0 : i32
    %c0_i32_1 = arith.constant 0 : i32
    return %c0_i32, %c0_i32_0 : i32, i32
  }
  func.func @transform_3(%arg0: i32, %arg1: i32) -> (i32, i32) {
    %c0_i32 = arith.constant 0 : i32
    %c0_i32_0 = arith.constant 0 : i32
    %c0_i32_1 = arith.constant 0 : i32
    return %c0_i32, %c0_i32_0 : i32, i32
  }
  func.func @transform_4(%arg0: i32, %arg1: i32) -> (i32, i32, i32) {
    %c0_i32 = arith.constant 0 : i32
    %c0_i32_0 = arith.constant 0 : i32
    return %arg1, %arg0, %c0_i32 : i32, i32, i32
  }
  func.func @transform_5(%arg0: i32, %arg1: i32) -> (i32, i32, i32) {
    %c0_i32 = arith.constant 0 : i32
    %c0_i32_0 = arith.constant 0 : i32
    return %arg1, %arg0, %c0_i32 : i32, i32, i32
  }
}

</mosaic_0001>

<llo_original>
// kernel: tpu_custom_call.1
$region0: #{tpu_custom_call.1}
  #allocation0 [shape = 'u32[]', space=smem, size = 0x4, offset = 0x4, fixed_abs, tag = 'smem constant byte address 0x4 - core index']
  #allocation1 [shape = 'u32[144,128]{1,0:T(1,128)}', space=vmem, size = 0x12000, scoped, tag = 'internal scratch']
  #allocation2 [shape = 'f32[8,384]{1,0:T(8,128)}', space=vmem, size = 0x3000, scoped, tag = 'scratch operand']
  #allocation3 [shape = 'f32[8,128]{1,0:T(8,128)}', space=vmem, size = 0x1000, scoped, tag = 'scratch operand']
  #allocation4 [shape = 'f32[8,128]{1,0:T(8,128)}', space=vmem, size = 0x1000, scoped, tag = 'scratch operand']
  %s0 = inlined_call_operand.hbm [shape: bf16[8,8,1024], index: 0, kind: input, shape index: {}]
  %s1 = inlined_call_operand.hbm [shape: bf16[1024,384], index: 1, kind: input, shape index: {}]
  %s2 = inlined_call_operand.hbm [shape: bf16[384,128], index: 2, kind: input, shape index: {}]
  %s3 = inlined_call_operand.hbm [shape: bf16[128,128], index: 3, kind: input, shape index: {}]
  %s4 = inlined_call_operand.hbm [shape: f32[8,8,128], index: 4, kind: output, shape index: {0}]
  %s5 = inlined_call_operand.hbm [shape: f32[8,8,128], index: 5, kind: output, shape index: {1}]
  %6 = xla_tuple %s4, %s5
  %s7 = sld [smem:[#allocation0]]
  $region77: #{tpu_custom_call.1} parent=0
    _
  %s9 = ssub.s32 1, %s7
  %s10 = scalar_select 0, %s9, %s7
  $region1: #{tpu_custom_call.1} parent=0
    #allocation5 [shape = 'u8[32768]{0}', space=vmem, size = 0x8000, scoped, tag = 'input window, operand 0']
    #allocation6 [shape = 's32[2]{0}', space=sflag, size = 0x8, scoped, tag = 'scoped memory for tpu_custom_call.1']
    #allocation7 [shape = 's32[2]{0}', space=sflag, size = 0x8, scoped, tag = 'scoped memory for tpu_custom_call.1']
    #allocation8 [shape = 'u8[786432]{0}', space=vmem, size = 0xc0000, scoped, tag = 'input window, operand 1, single buffered']
    #allocation9 [shape = 's32[1]{0}', space=sflag, size = 0x4, scoped, tag = 'scoped memory for tpu_custom_call.1']
    #allocation10 [shape = 'u8[98304]{0}', space=vmem, size = 0x18000, scoped, tag = 'input window, operand 2, single buffered']
    #allocation11 [shape = 'u8[32768]{0}', space=vmem, size = 0x8000, scoped, tag = 'input window, operand 3, single buffered']
    #allocation12 [shape = 's32[1]{0}', space=sflag, size = 0x4, scoped, tag = 'scoped memory for tpu_custom_call.1']
    #allocation13 [shape = 'u8[8192]{0}', space=vmem, size = 0x2000, scoped, tag = 'output window, operand 0']
    #allocation14 [shape = 'u8[8192]{0}', space=vmem, size = 0x2000, scoped, tag = 'output window, operand 1']
    #allocation15 [shape = 's32[2]{0}', space=sflag, size = 0x8, scoped, tag = 'scoped memory for tpu_custom_call.1']
    %11 = vsyncpa [#allocation6], 0
    %s12 = scalar_lea.sflag [#allocation6], 1
    %13 = vsyncpa %s12, 0
    %14 = vsyncpa [#allocation9], 0
    %15 = vsyncpa [#allocation12], 0
    %16 = vsyncpa [#allocation7], 0
    %s17 = scalar_lea.sflag [#allocation7], 1
    %18 = vsyncpa %s17, 0
    %19 = vsyncpa [#allocation15], 0
    %s20 = scalar_lea.sflag [#allocation15], 1
    %21 = vsyncpa %s20, 0
    loop: start=0, step=1, limit=10
    $region2: #{tpu_custom_call.1} parent=1 // loop_pre_header
      _
    $region3: #{tpu_custom_call.1} parent=1 // loop_header
      %s23 = sphi 0, %s27
      %p24 = scmp.ge.s32.totalorder %s23, 10
      %s30 = sphi 0, %s42
      %s31 = sphi 0, %s38
      %s32 = sphi 0, %s30
      %s33 = sphi 0, %s31
      %s34 = sphi 0, %s32
      %s35 = sphi 0, %s33
      %s47 = sphi 0, %s49
      %s50 = sphi 0, %s47
      %s51 = sphi 0, %s50
      %s67 = sphi 0, %s51
      %s71 = sphi 0, %s71
      %s73 = sphi 0, %s71
      %s74 = sphi 0, %s73
      %s88 = sphi 0, %s74
      %s92 = sphi 0, %s92
      %s94 = sphi 0, %s92
      %s95 = sphi 0, %s94
      %s109 = sphi 0, %s95
      %s113 = sphi 0, %s113
      %s115 = sphi 0, %s113
      %s116 = sphi 0, %s115
      %s130 = sphi 0, %s116
      %s138 = sphi 0, %s140
      %s141 = sphi 0, %s138
      %s142 = sphi 0, %s141
      %s158 = sphi 0, %s142
      %s166 = sphi 0, %s168
      %s169 = sphi 0, %s166
      %s170 = sphi 0, %s169
      %s186 = sphi 0, %s170
    $region4: #{tpu_custom_call.1} parent=1 // loop_header_branch
      %26 = sbr.rel (%p24) target = $region8
    $region5: #{tpu_custom_call.1} parent=1 // loop_body
      %s28 = ssub.s32 %s23, 1
      %s29 = ssub.s32 %s23, 2
      %s36 = sadd.s32 1, %s31
      %p37 = scmp.ge.s32.totalorder %s36, 8
      %s38 = scalar_select %p37, 0, %s36
      %s39 = sadd.s32 1, %s30
      %s40 = scalar_select %p37, %s39, %s30
      %p41 = scmp.ge.s32.totalorder %s40, 1
      %s42 = scalar_select %p41, 0, %s40
      %s43 = ssub.s32 %s31, %s38
      %s44 = ssub.s32 %s30, %s42
      %s45 = sor.u32 %s43, %s44
      %p46 = scmp.eq.s32.totalorder %s45, 0
      %s48 = sadd.s32 %s47, 1
      %s49 = scalar_select %p46, %s47, %s48
      %p52 = pneg %p46
      %p53 = scmp.eq.s32.totalorder %s23, 7
      %p54 = por %p52, %p53
      %p55 = scmp.ne.s32.totalorder %s47, %s50
      %p56 = scmp.eq.s32.totalorder %s23, 0
      %p57 = por %p55, %p56
      %p58 = scmp.ne.s32.totalorder %s47, %s50
      %p59 = scmp.eq.s32.totalorder %s28, 7
      %p60 = por %p58, %p59
      %p61 = scmp.ne.s32.totalorder %s50, %s51
      %p62 = scmp.eq.s32.totalorder %s28, 0
      %p63 = por %p61, %p62
      %p64 = scmp.ne.s32.totalorder %s50, %s51
      %p65 = scmp.eq.s32.totalorder %s29, 7
      %p66 = por %p64, %p65
      %p68 = scmp.ne.s32.totalorder %s51, %s67
      %p69 = scmp.eq.s32.totalorder %s29, 0
      %p70 = por %p68, %p69
      %s72 = sadd.s32 %s71, 1
      %p75 = scmp.eq.s32.totalorder %s23, 7
      %p76 = scmp.ne.s32.totalorder %s71, %s73
      %p77 = scmp.eq.s32.totalorder %s23, 0
      %p78 = por %p76, %p77
      %p79 = scmp.ne.s32.totalorder %s71, %s73
      %p80 = scmp.eq.s32.totalorder %s28, 7
      %p81 = por %p79, %p80
      %p82 = scmp.ne.s32.totalorder %s73, %s74
      %p83 = scmp.eq.s32.totalorder %s28, 0
      %p84 = por %p82, %p83
      %p85 = scmp.ne.s32.totalorder %s73, %s74
      %p86 = scmp.eq.s32.totalorder %s29, 7
      %p87 = por %p85, %p86
      %p89 = scmp.ne.s32.totalorder %s74, %s88
      %p90 = scmp.eq.s32.totalorder %s29, 0
      %p91 = por %p89, %p90
      %s93 = sadd.s32 %s92, 1
      %p96 = scmp.eq.s32.totalorder %s23, 7
      %p97 = scmp.ne.s32.totalorder %s92, %s94
      %p98 = scmp.eq.s32.totalorder %s23, 0
      %p99 = por %p97, %p98
      %p100 = scmp.ne.s32.totalorder %s92, %s94
      %p101 = scmp.eq.s32.totalorder %s28, 7
      %p102 = por %p100, %p101
      %p103 = scmp.ne.s32.totalorder %s94, %s95
      %p104 = scmp.eq.s32.totalorder %s28, 0
      %p105 = por %p103, %p104
      %p106 = scmp.ne.s32.totalorder %s94, %s95
      %p107 = scmp.eq.s32.totalorder %s29, 7
      %p108 = por %p106, %p107
      %p110 = scmp.ne.s32.totalorder %s95, %s109
      %p111 = scmp.eq.s32.totalorder %s29, 0
      %p112 = por %p110, %p111
      %s114 = sadd.s32 %s113, 1
      %p117 = scmp.eq.s32.totalorder %s23, 7
      %p118 = scmp.ne.s32.totalorder %s113, %s115
      %p119 = scmp.eq.s32.totalorder %s23, 0
      %p120 = por %p118, %p119
      %p121 = scmp.ne.s32.totalorder %s113, %s115
      %p122 = scmp.eq.s32.totalorder %s28, 7
      %p123 = por %p121, %p122
      %p124 = scmp.ne.s32.totalorder %s115, %s116
      %p125 = scmp.eq.s32.totalorder %s28, 0
      %p126 = por %p124, %p125
      %p127 = scmp.ne.s32.totalorder %s115, %s116
      %p128 = scmp.eq.s32.totalorder %s29, 7
      %p129 = por %p127, %p128
      %p131 = scmp.ne.s32.totalorder %s116, %s130
      %p132 = scmp.eq.s32.totalorder %s29, 0
      %p133 = por %p131, %p132
      %s134 = ssub.s32 %s31, %s38
      %s135 = ssub.s32 %s30, %s42
      %s136 = sor.u32 %s134, %s135
      %p137 = scmp.eq.s32.totalorder %s136, 0
      %s139 = sadd.s32 %s138, 1
      %s140 = scalar_select %p137, %s138, %s139
      %p143 = pneg %p137
      %p144 = scmp.eq.s32.totalorder %s23, 7
      %p145 = por %p143, %p144
      %p146 = scmp.ne.s32.totalorder %s138, %s141
      %p147 = scmp.eq.s32.totalorder %s23, 0
      %p148 = por %p146, %p147
      %p149 = scmp.ne.s32.totalorder %s138, %s141
      %p150 = scmp.eq.s32.totalorder %s28, 7
      %p151 = por %p149, %p150
      %p152 = scmp.ne.s32.totalorder %s141, %s142
      %p153 = scmp.eq.s32.totalorder %s28, 0
      %p154 = por %p152, %p153
      %p155 = scmp.ne.s32.totalorder %s141, %s142
      %p156 = scmp.eq.s32.totalorder %s29, 7
      %p157 = por %p155, %p156
      %p159 = scmp.ne.s32.totalorder %s142, %s158
      %p160 = scmp.eq.s32.totalorder %s29, 0
      %p161 = por %p159, %p160
      %s162 = ssub.s32 %s31, %s38
      %s163 = ssub.s32 %s30, %s42
      %s164 = sor.u32 %s162, %s163
      %p165 = scmp.eq.s32.totalorder %s164, 0
      %s167 = sadd.s32 %s166, 1
      %s168 = scalar_select %p165, %s166, %s167
      %p171 = pneg %p165
      %p172 = scmp.eq.s32.totalorder %s23, 7
      %p173 = por %p171, %p172
      %p174 = scmp.ne.s32.totalorder %s166, %s169
      %p175 = scmp.eq.s32.totalorder %s23, 0
      %p176 = por %p174, %p175
      %p177 = scmp.ne.s32.totalorder %s166, %s169
      %p178 = scmp.eq.s32.totalorder %s28, 7
      %p179 = por %p177, %p178
      %p180 = scmp.ne.s32.totalorder %s169, %s170
      %p181 = scmp.eq.s32.totalorder %s28, 0
      %p182 = por %p180, %p181
      %p183 = scmp.ne.s32.totalorder %s169, %s170
      %p184 = scmp.eq.s32.totalorder %s29, 7
      %p185 = por %p183, %p184
      %p187 = scmp.ne.s32.totalorder %s170, %s186
      %p188 = scmp.eq.s32.totalorder %s29, 0
      %p189 = por %p187, %p188
      %p190 = scmp.le.s32.totalorder 1, %s23
      %p191 = scmp.lt.s32.totalorder %s23, 9
      %p192 = pnand %p190, %p191
      %p193 = pneg %p192
      // Predicated region
      $region9: #{tpu_custom_call.1} parent=5 // pred_check
        _
      $region10: #{tpu_custom_call.1} parent=5 // pred_check_branch
        %195 = sbr.rel (%p192) target = $region12
      $region11: #{tpu_custom_call.1} parent=5 // pred_region
        %s196 = ssub.s32 %s23, 1
        // Predicated region
        $region13: #{tpu_custom_call.1} parent=11 // pred_check
          %p197 = pneg %p84
        $region14: #{tpu_custom_call.1} parent=11 // pred_check_branch
          %199 = sbr.rel (%p197) target = $region16
        $region15: #{tpu_custom_call.1} parent=11 // pred_region
          %s201 = ssub.s32 24576, 24576
          %202 = vsyncadd [#allocation9], %s201
          %s203 = sshll.u32 [#allocation8], 4
          %s204 = int_to_ptr.vmem [resolvable:$true] %s203
          %209 = dma.hbm_to_vmem [thread:$0]  %s1, 24576, %s204, [#allocation9], 192, 192, 12
        $region16: #{tpu_custom_call.1} parent=11 // pred_fallthru
          _
        // Predicated region
        $region17: #{tpu_custom_call.1} parent=11 // pred_check
          %p210 = pneg %p105
        $region18: #{tpu_custom_call.1} parent=11 // pred_check_branch
          %212 = sbr.rel (%p210) target = $region20
        $region19: #{tpu_custom_call.1} parent=11 // pred_region
          %s214 = ssub.s32 3072, 3072
          %215 = vsyncadd [#allocation9], %s214
          %s216 = sshll.u32 [#allocation10], 4
          %s217 = int_to_ptr.vmem [resolvable:$true] %s216
          %222 = dma.hbm_to_vmem [thread:$0]  %s2, 3072, %s217, [#allocation9], 64, 64, 4
        $region20: #{tpu_custom_call.1} parent=11 // pred_fallthru
          _
        // Predicated region
        $region21: #{tpu_custom_call.1} parent=11 // pred_check
          %p223 = pneg %p126
        $region22: #{tpu_custom_call.1} parent=11 // pred_check_branch
          %225 = sbr.rel (%p223) target = $region24
        $region23: #{tpu_custom_call.1} parent=11 // pred_region
          %s227 = ssub.s32 1024, 1024
          %228 = vsyncadd [#allocation12], %s227
          %s229 = sshll.u32 [#allocation11], 4
          %s230 = int_to_ptr.vmem [resolvable:$true] %s229
          %235 = dma.hbm_to_vmem [thread:$0]  %s3, 1024, %s230, [#allocation12], 64, 64, 4
        $region24: #{tpu_custom_call.1} parent=11 // pred_fallthru
          _
      $region12: #{tpu_custom_call.1} parent=5 // pred_fallthru
        _
      %p236 = scmp.lt.s32.totalorder %s23, 8
      // Predicated region
      $region25: #{tpu_custom_call.1} parent=5 // pred_check
        %p237 = pneg %p236
      $region26: #{tpu_custom_call.1} parent=5 // pred_check_branch
        %239 = sbr.rel (%p237) target = $region28
      $region27: #{tpu_custom_call.1} parent=5 // pred_region
        // Predicated region
        $region29: #{tpu_custom_call.1} parent=27 // pred_check
          %p240 = pneg %p57
        $region30: #{tpu_custom_call.1} parent=27 // pred_check_branch
          %242 = sbr.rel (%p240) target = $region32
        $region31: #{tpu_custom_call.1} parent=27 // pred_region
          %s243 = sand.u32 %s47, 1
          %s244 = scalar_lea.sflag [#allocation6], %s243
          %s245 = sand.u32 %s47, 1
          %s246 = smul.addr %s245, 32
          %s247 = scalar_lea.vmem [#allocation5], %s246
          %s249 = ssub.s32 512, 512
          %250 = vsyncadd %s244, %s249
          %s251 = smul.addr %s30, 8
          %s252 = smul.addr %s31, 8
          %s253 = sadd.s32 %s251, %s252
          %s254 = smul.addr %s253, 64
          %s255 = scalar_lea.hbm %s0, %s254
          %s257 = sshll.u32 %s247, 4
          %s258 = int_to_ptr.vmem [resolvable:$true] %s257
          %260 = dma.hbm_to_vmem [thread:$0]  %s255, 512, %s258, %s244
        $region32: #{tpu_custom_call.1} parent=27 // pred_fallthru
          _
      $region28: #{tpu_custom_call.1} parent=5 // pred_fallthru
        _
      %p261 = scmp.le.s32.totalorder 1, %s23
      %p262 = scmp.lt.s32.totalorder %s23, 9
      %p263 = pnand %p261, %p262
      %p264 = pneg %p263
      // Predicated region
      $region33: #{tpu_custom_call.1} parent=5 // pred_check
        _
      $region34: #{tpu_custom_call.1} parent=5 // pred_check_branch
        %266 = sbr.rel (%p263) target = $region36
      $region35: #{tpu_custom_call.1} parent=5 // pred_region
        %s267 = ssub.s32 %s23, 1
        %s268 = sand.u32 %s50, 1
        %s269 = scalar_lea.sflag [#allocation6], %s268
        %s270 = sand.u32 %s50, 1
        %s271 = smul.addr %s270, 32
        %s272 = scalar_lea.vmem [#allocation5], %s271
        // Predicated region
        $region37: #{tpu_custom_call.1} parent=35 // pred_check
          %p273 = pneg %p63
        $region38: #{tpu_custom_call.1} parent=35 // pred_check_branch
          %275 = sbr.rel (%p273) target = $region40
        $region39: #{tpu_custom_call.1} parent=35 // pred_region
          %276 = dma.done %s269, 512
        $region40: #{tpu_custom_call.1} parent=35 // pred_fallthru
          _
        // Predicated region
        $region41: #{tpu_custom_call.1} parent=35 // pred_check
          %p277 = pneg %p84
        $region42: #{tpu_custom_call.1} parent=35 // pred_check_branch
          %279 = sbr.rel (%p277) target = $region44
        $region43: #{tpu_custom_call.1} parent=35 // pred_region
          %280 = dma.done [#allocation9], 24576
        $region44: #{tpu_custom_call.1} parent=35 // pred_fallthru
          _
        // Predicated region
        $region45: #{tpu_custom_call.1} parent=35 // pred_check
          %p281 = pneg %p105
        $region46: #{tpu_custom_call.1} parent=35 // pred_check_branch
          %283 = sbr.rel (%p281) target = $region48
        $region47: #{tpu_custom_call.1} parent=35 // pred_region
          %284 = dma.done [#allocation9], 3072
        $region48: #{tpu_custom_call.1} parent=35 // pred_fallthru
          _
        // Predicated region
        $region49: #{tpu_custom_call.1} parent=35 // pred_check
          %p285 = pneg %p126
        $region50: #{tpu_custom_call.1} parent=35 // pred_check_branch
          %287 = sbr.rel (%p285) target = $region52
        $region51: #{tpu_custom_call.1} parent=35 // pred_region
          %288 = dma.done [#allocation12], 1024
        $region52: #{tpu_custom_call.1} parent=35 // pred_fallthru
          _
        %s289 = sand.u32 %s50, 1
        %s290 = scalar_lea.sflag [#allocation6], %s289
        %s291 = sand.u32 %s50, 1
        %s292 = smul.addr %s291, 32
        %s293 = scalar_lea.vmem [#allocation5], %s292
        %p294 = pneg %p63
        %p295 = pneg %p60
        %p296 = pneg %p84
        %p297 = pneg %p81
        %p298 = pneg %p105
        %p299 = pneg %p102
        %p300 = pneg %p126
        %p301 = pneg %p123
        %p302 = pneg %p154
        %p303 = pneg %p151
        %s304 = sand.u32 %s141, 1
        %s305 = scalar_lea.sflag [#allocation7], %s304
        %s306 = sand.u32 %s141, 1
        %s307 = smul.addr %s306, 8
        %s308 = scalar_lea.vmem [#allocation13], %s307
        %p309 = pneg %p182
        %p310 = pneg %p179
        %s311 = sand.u32 %s169, 1
        %s312 = scalar_lea.sflag [#allocation15], %s311
        %s313 = sand.u32 %s169, 1
        %s314 = smul.addr %s313, 8
        %s315 = scalar_lea.vmem [#allocation14], %s314
        %p317 = scmp.eq.s32.totalorder %s33, 0
        // Predicated region
        $region53: #{tpu_custom_call.1} parent=35 // pred_check
          %p318 = pneg %p317
        $region54: #{tpu_custom_call.1} parent=35 // pred_check_branch
          %320 = sbr.rel (%p318) target = $region56
        $region55: #{tpu_custom_call.1} parent=35 // pred_region
          %321 = vst [vmem:[#allocation2] sm:$0xff] 0.0
          %322 = vst [vmem:[#allocation2 + $0x8] sm:$0xff] 0.0
          %323 = vst [vmem:[#allocation2 + $0x10] sm:$0xff] 0.0
          %324 = vst [vmem:[#allocation3] sm:$0xff] 0.0
          %325 = vst [vmem:[#allocation4] sm:$0xff] 0.0
        $region56: #{tpu_custom_call.1} parent=35 // pred_fallthru
          _
        %v326 = vld [vmem:[%s272] sm:$0xff]
        %v327 = vld [vmem:[%s272 + $0x8] sm:$0xff]
        %v328 = vld [vmem:[%s272 + $0x10] sm:$0xff]
        %v329 = vld [vmem:[%s272 + $0x18] sm:$0xff]
        %v330 = vld [vmem:[#allocation8] sm:$0xff]
        %v331 = vld [vmem:[#allocation8 + $0x8] sm:$0xf]
        %v332 = vld [vmem:[#allocation8 + $0xc] sm:$0xff]
        %v333 = vld [vmem:[#allocation8 + $0x14] sm:$0xf]
        %v334 = vld [vmem:[#allocation8 + $0x18] sm:$0xff]
        %v335 = vld [vmem:[#allocation8 + $0x20] sm:$0xf]
        %v336 = vld [vmem:[#allocation8 + $0x24] sm:$0xff]
        %v337 = vld [vmem:[#allocation8 + $0x2c] sm:$0xf]
        %v338 = vld [vmem:[#allocation8 + $0x30] sm:$0xff]
        %v339 = vld [vmem:[#allocation8 + $0x38] sm:$0xf]
        %v340 = vld [vmem:[#allocation8 + $0x3c] sm:$0xff]
        %v341 = vld [vmem:[#allocation8 + $0x44] sm:$0xf]
        %v342 = vld [vmem:[#allocation8 + $0x48] sm:$0xff]
        %v343 = vld [vmem:[#allocation8 + $0x50] sm:$0xf]
        %v344 = vld [vmem:[#allocation8 + $0x54] sm:$0xff]
        %v345 = vld [vmem:[#allocation8 + $0x5c] sm:$0xf]
        %v346 = vld [vmem:[#allocation8 + $0x60] sm:$0xff]
        %v347 = vld [vmem:[#allocation8 + $0x68] sm:$0xf]
        %v348 = vld [vmem:[#allocation8 + $0x6c] sm:$0xff]
        %v349 = vld [vmem:[#allocation8 + $0x74] sm:$0xf]
        %v350 = vld [vmem:[#allocation8 + $0x78] sm:$0xff]
        %v351 = vld [vmem:[#allocation8 + $0x80] sm:$0xf]
        %v352 = vld [vmem:[#allocation8 + $0x84] sm:$0xff]
        %v353 = vld [vmem:[#allocation8 + $0x8c] sm:$0xf]
        %v354 = vld [vmem:[#allocation8 + $0x90] sm:$0xff]
        %v355 = vld [vmem:[#allocation8 + $0x98] sm:$0xf]
        %v356 = vld [vmem:[#allocation8 + $0x9c] sm:$0xff]
        %v357 = vld [vmem:[#allocation8 + $0xa4] sm:$0xf]
        %v358 = vld [vmem:[#allocation8 + $0xa8] sm:$0xff]
        %v359 = vld [vmem:[#allocation8 + $0xb0] sm:$0xf]
        %v360 = vld [vmem:[#allocation8 + $0xb4] sm:$0xff]
        %v361 = vld [vmem:[#allocation8 + $0xbc] sm:$0xf]
        %v362 = vld [vmem:[#allocation8 + $0xc0] sm:$0xff]
        %v363 = vld [vmem:[#allocation8 + $0xc8] sm:$0xf]
        %v364 = vld [vmem:[#allocation8 + $0xcc] sm:$0xff]
        %v365 = vld [vmem:[#allocation8 + $0xd4] sm:$0xf]
        %v366 = vld [vmem:[#allocation8 + $0xd8] sm:$0xff]
        %v367 = vld [vmem:[#allocation8 + $0xe0] sm:$0xf]
        %v368 = vld [vmem:[#allocation8 + $0xe4] sm:$0xff]
        %v369 = vld [vmem:[#allocation8 + $0xec] sm:$0xf]
        %v370 = vld [vmem:[#allocation8 + $0xf0] sm:$0xff]
        %v371 = vld [vmem:[#allocation8 + $0xf8] sm:$0xf]
        %v372 = vld [vmem:[#allocation8 + $0xfc] sm:$0xff]
        %v373 = vld [vmem:[#allocation8 + $0x104] sm:$0xf]
        %v374 = vld [vmem:[#allocation8 + $0x108] sm:$0xff]
        %v375 = vld [vmem:[#allocation8 + $0x110] sm:$0xf]
        %v376 = vld [vmem:[#allocation8 + $0x114] sm:$0xff]
        %v377 = vld [vmem:[#allocation8 + $0x11c] sm:$0xf]
        %v378 = vld [vmem:[#allocation8 + $0x120] sm:$0xff]
        %v379 = vld [vmem:[#allocation8 + $0x128] sm:$0xf]
        %v380 = vld [vmem:[#allocation8 + $0x12c] sm:$0xff]
        %v381 = vld [vmem:[#allocation8 + $0x134] sm:$0xf]
        %v382 = vld [vmem:[#allocation8 + $0x138] sm:$0xff]
        %v383 = vld [vmem:[#allocation8 + $0x140] sm:$0xf]
        %v384 = vld [vmem:[#allocation8 + $0x144] sm:$0xff]
        %v385 = vld [vmem:[#allocation8 + $0x14c] sm:$0xf]
        %v386 = vld [vmem:[#allocation8 + $0x150] sm:$0xff]
        %v387 = vld [vmem:[#allocation8 + $0x158] sm:$0xf]
        %v388 = vld [vmem:[#allocation8 + $0x15c] sm:$0xff]
        %v389 = vld [vmem:[#allocation8 + $0x164] sm:$0xf]
        %v390 = vld [vmem:[#allocation8 + $0x168] sm:$0xff]
        %v391 = vld [vmem:[#allocation8 + $0x170] sm:$0xf]
        %v392 = vld [vmem:[#allocation8 + $0x174] sm:$0xff]
        %v393 = vld [vmem:[#allocation8 + $0x17c] sm:$0xf]
        %v394 = vld [vmem:[#allocation8 + $0x180] sm:$0xff]
        %v395 = vld [vmem:[#allocation8 + $0x188] sm:$0xf]
        %v396 = vld [vmem:[#allocation8 + $0x18c] sm:$0xff]
        %v397 = vld [vmem:[#allocation8 + $0x194] sm:$0xf]
        %v398 = vld [vmem:[#allocation8 + $0x198] sm:$0xff]
        %v399 = vld [vmem:[#allocation8 + $0x1a0] sm:$0xf]
        %v400 = vld [vmem:[#allocation8 + $0x1a4] sm:$0xff]
        %v401 = vld [vmem:[#allocation8 + $0x1ac] sm:$0xf]
        %v402 = vld [vmem:[#allocation8 + $0x1b0] sm:$0xff]
        %v403 = vld [vmem:[#allocation8 + $0x1b8] sm:$0xf]
        %v404 = vld [vmem:[#allocation8 + $0x1bc] sm:$0xff]
        %v405 = vld [vmem:[#allocation8 + $0x1c4] sm:$0xf]
        %v406 = vld [vmem:[#allocation8 + $0x1c8] sm:$0xff]
        %v407 = vld [vmem:[#allocation8 + $0x1d0] sm:$0xf]
        %v408 = vld [vmem:[#allocation8 + $0x1d4] sm:$0xff]
        %v409 = vld [vmem:[#allocation8 + $0x1dc] sm:$0xf]
        %v410 = vld [vmem:[#allocation8 + $0x1e0] sm:$0xff]
        %v411 = vld [vmem:[#allocation8 + $0x1e8] sm:$0xf]
        %v412 = vld [vmem:[#allocation8 + $0x1ec] sm:$0xff]
        %v413 = vld [vmem:[#allocation8 + $0x1f4] sm:$0xf]
        %v414 = vld [vmem:[#allocation8 + $0x1f8] sm:$0xff]
        %v415 = vld [vmem:[#allocation8 + $0x200] sm:$0xf]
        %v416 = vld [vmem:[#allocation8 + $0x204] sm:$0xff]
        %v417 = vld [vmem:[#allocation8 + $0x20c] sm:$0xf]
        %v418 = vld [vmem:[#allocation8 + $0x210] sm:$0xff]
        %v419 = vld [vmem:[#allocation8 + $0x218] sm:$0xf]
        %v420 = vld [vmem:[#allocation8 + $0x21c] sm:$0xff]
        %v421 = vld [vmem:[#allocation8 + $0x224] sm:$0xf]
        %v422 = vld [vmem:[#allocation8 + $0x228] sm:$0xff]
        %v423 = vld [vmem:[#allocation8 + $0x230] sm:$0xf]
        %v424 = vld [vmem:[#allocation8 + $0x234] sm:$0xff]
        %v425 = vld [vmem:[#allocation8 + $0x23c] sm:$0xf]
        %v426 = vld [vmem:[#allocation8 + $0x240] sm:$0xff]
        %v427 = vld [vmem:[#allocation8 + $0x248] sm:$0xf]
        %v428 = vld [vmem:[#allocation8 + $0x24c] sm:$0xff]
        %v429 = vld [vmem:[#allocation8 + $0x254] sm:$0xf]
        %v430 = vld [vmem:[#allocation8 + $0x258] sm:$0xff]
        %v431 = vld [vmem:[#allocation8 + $0x260] sm:$0xf]
        %v432 = vld [vmem:[#allocation8 + $0x264] sm:$0xff]
        %v433 = vld [vmem:[#allocation8 + $0x26c] sm:$0xf]
        %v434 = vld [vmem:[#allocation8 + $0x270] sm:$0xff]
        %v435 = vld [vmem:[#allocation8 + $0x278] sm:$0xf]
        %v436 = vld [vmem:[#allocation8 + $0x27c] sm:$0xff]
        %v437 = vld [vmem:[#allocation8 + $0x284] sm:$0xf]
        %v438 = vld [vmem:[#allocation8 + $0x288] sm:$0xff]
        %v439 = vld [vmem:[#allocation8 + $0x290] sm:$0xf]
        %v440 = vld [vmem:[#allocation8 + $0x294] sm:$0xff]
        %v441 = vld [vmem:[#allocation8 + $0x29c] sm:$0xf]
        %v442 = vld [vmem:[#allocation8 + $0x2a0] sm:$0xff]
        %v443 = vld [vmem:[#allocation8 + $0x2a8] sm:$0xf]
        %v444 = vld [vmem:[#allocation8 + $0x2ac] sm:$0xff]
        %v445 = vld [vmem:[#allocation8 + $0x2b4] sm:$0xf]
        %v446 = vld [vmem:[#allocation8 + $0x2b8] sm:$0xff]
        %v447 = vld [vmem:[#allocation8 + $0x2c0] sm:$0xf]
        %v448 = vld [vmem:[#allocation8 + $0x2c4] sm:$0xff]
        %v449 = vld [vmem:[#allocation8 + $0x2cc] sm:$0xf]
        %v450 = vld [vmem:[#allocation8 + $0x2d0] sm:$0xff]
        %v451 = vld [vmem:[#allocation8 + $0x2d8] sm:$0xf]
        %v452 = vld [vmem:[#allocation8 + $0x2dc] sm:$0xff]
        %v453 = vld [vmem:[#allocation8 + $0x2e4] sm:$0xf]
        %v454 = vld [vmem:[#allocation8 + $0x2e8] sm:$0xff]
        %v455 = vld [vmem:[#allocation8 + $0x2f0] sm:$0xf]
        %v456 = vld [vmem:[#allocation8 + $0x2f4] sm:$0xff]
        %v457 = vld [vmem:[#allocation8 + $0x2fc] sm:$0xf]
        %v458 = vld [vmem:[#allocation8 + $0x300] sm:$0xff]
        %v459 = vld [vmem:[#allocation8 + $0x308] sm:$0xf]
        %v460 = vld [vmem:[#allocation8 + $0x30c] sm:$0xff]
        %v461 = vld [vmem:[#allocation8 + $0x314] sm:$0xf]
        %v462 = vld [vmem:[#allocation8 + $0x318] sm:$0xff]
        %v463 = vld [vmem:[#allocation8 + $0x320] sm:$0xf]
        %v464 = vld [vmem:[#allocation8 + $0x324] sm:$0xff]
        %v465 = vld [vmem:[#allocation8 + $0x32c] sm:$0xf]
        %v466 = vld [vmem:[#allocation8 + $0x330] sm:$0xff]
        %v467 = vld [vmem:[#allocation8 + $0x338] sm:$0xf]
        %v468 = vld [vmem:[#allocation8 + $0x33c] sm:$0xff]
        %v469 = vld [vmem:[#allocation8 + $0x344] sm:$0xf]
        %v470 = vld [vmem:[#allocation8 + $0x348] sm:$0xff]
        %v471 = vld [vmem:[#allocation8 + $0x350] sm:$0xf]
        %v472 = vld [vmem:[#allocation8 + $0x354] sm:$0xff]
        %v473 = vld [vmem:[#allocation8 + $0x35c] sm:$0xf]
        %v474 = vld [vmem:[#allocation8 + $0x360] sm:$0xff]
        %v475 = vld [vmem:[#allocation8 + $0x368] sm:$0xf]
        %v476 = vld [vmem:[#allocation8 + $0x36c] sm:$0xff]
        %v477 = vld [vmem:[#allocation8 + $0x374] sm:$0xf]
        %v478 = vld [vmem:[#allocation8 + $0x378] sm:$0xff]
        %v479 = vld [vmem:[#allocation8 + $0x380] sm:$0xf]
        %v480 = vld [vmem:[#allocation8 + $0x384] sm:$0xff]
        %v481 = vld [vmem:[#allocation8 + $0x38c] sm:$0xf]
        %v482 = vld [vmem:[#allocation8 + $0x390] sm:$0xff]
        %v483 = vld [vmem:[#allocation8 + $0x398] sm:$0xf]
        %v484 = vld [vmem:[#allocation8 + $0x39c] sm:$0xff]
        %v485 = vld [vmem:[#allocation8 + $0x3a4] sm:$0xf]
        %v486 = vld [vmem:[#allocation8 + $0x3a8] sm:$0xff]
        %v487 = vld [vmem:[#allocation8 + $0x3b0] sm:$0xf]
        %v488 = vld [vmem:[#allocation8 + $0x3b4] sm:$0xff]
        %v489 = vld [vmem:[#allocation8 + $0x3bc] sm:$0xf]
        %v490 = vld [vmem:[#allocation8 + $0x3c0] sm:$0xff]
        %v491 = vld [vmem:[#allocation8 + $0x3c8] sm:$0xf]
        %v492 = vld [vmem:[#allocation8 + $0x3cc] sm:$0xff]
        %v493 = vld [vmem:[#allocation8 + $0x3d4] sm:$0xf]
        %v494 = vld [vmem:[#allocation8 + $0x3d8] sm:$0xff]
        %v495 = vld [vmem:[#allocation8 + $0x3e0] sm:$0xf]
        %v496 = vld [vmem:[#allocation8 + $0x3e4] sm:$0xff]
        %v497 = vld [vmem:[#allocation8 + $0x3ec] sm:$0xf]
        %v498 = vld [vmem:[#allocation8 + $0x3f0] sm:$0xff]
        %v499 = vld [vmem:[#allocation8 + $0x3f8] sm:$0xf]
        %v500 = vld [vmem:[#allocation8 + $0x3fc] sm:$0xff]
        %v501 = vld [vmem:[#allocation8 + $0x404] sm:$0xf]
        %v502 = vld [vmem:[#allocation8 + $0x408] sm:$0xff]
        %v503 = vld [vmem:[#allocation8 + $0x410] sm:$0xf]
        %v504 = vld [vmem:[#allocation8 + $0x414] sm:$0xff]
        %v505 = vld [vmem:[#allocation8 + $0x41c] sm:$0xf]
        %v506 = vld [vmem:[#allocation8 + $0x420] sm:$0xff]
        %v507 = vld [vmem:[#allocation8 + $0x428] sm:$0xf]
        %v508 = vld [vmem:[#allocation8 + $0x42c] sm:$0xff]
        %v509 = vld [vmem:[#allocation8 + $0x434] sm:$0xf]
        %v510 = vld [vmem:[#allocation8 + $0x438] sm:$0xff]
        %v511 = vld [vmem:[#allocation8 + $0x440] sm:$0xf]
        %v512 = vld [vmem:[#allocation8 + $0x444] sm:$0xff]
        %v513 = vld [vmem:[#allocation8 + $0x44c] sm:$0xf]
        %v514 = vld [vmem:[#allocation8 + $0x450] sm:$0xff]
        %v515 = vld [vmem:[#allocation8 + $0x458] sm:$0xf]
        %v516 = vld [vmem:[#allocation8 + $0x45c] sm:$0xff]
        %v517 = vld [vmem:[#allocation8 + $0x464] sm:$0xf]
        %v518 = vld [vmem:[#allocation8 + $0x468] sm:$0xff]
        %v519 = vld [vmem:[#allocation8 + $0x470] sm:$0xf]
        %v520 = vld [vmem:[#allocation8 + $0x474] sm:$0xff]
        %v521 = vld [vmem:[#allocation8 + $0x47c] sm:$0xf]
        %v522 = vld [vmem:[#allocation8 + $0x480] sm:$0xff]
        %v523 = vld [vmem:[#allocation8 + $0x488] sm:$0xf]
        %v524 = vld [vmem:[#allocation8 + $0x48c] sm:$0xff]
        %v525 = vld [vmem:[#allocation8 + $0x494] sm:$0xf]
        %v526 = vld [vmem:[#allocation8 + $0x498] sm:$0xff]
        %v527 = vld [vmem:[#allocation8 + $0x4a0] sm:$0xf]
        %v528 = vld [vmem:[#allocation8 + $0x4a4] sm:$0xff]
        %v529 = vld [vmem:[#allocation8 + $0x4ac] sm:$0xf]
        %v530 = vld [vmem:[#allocation8 + $0x4b0] sm:$0xff]
        %v531 = vld [vmem:[#allocation8 + $0x4b8] sm:$0xf]
        %v532 = vld [vmem:[#allocation8 + $0x4bc] sm:$0xff]
        %v533 = vld [vmem:[#allocation8 + $0x4c4] sm:$0xf]
        %v534 = vld [vmem:[#allocation8 + $0x4c8] sm:$0xff]
        %v535 = vld [vmem:[#allocation8 + $0x4d0] sm:$0xf]
        %v536 = vld [vmem:[#allocation8 + $0x4d4] sm:$0xff]
        %v537 = vld [vmem:[#allocation8 + $0x4dc] sm:$0xf]
        %v538 = vld [vmem:[#allocation8 + $0x4e0] sm:$0xff]
        %v539 = vld [vmem:[#allocation8 + $0x4e8] sm:$0xf]
        %v540 = vld [vmem:[#allocation8 + $0x4ec] sm:$0xff]
        %v541 = vld [vmem:[#allocation8 + $0x4f4] sm:$0xf]
        %v542 = vld [vmem:[#allocation8 + $0x4f8] sm:$0xff]
        %v543 = vld [vmem:[#allocation8 + $0x500] sm:$0xf]
        %v544 = vld [vmem:[#allocation8 + $0x504] sm:$0xff]
        %v545 = vld [vmem:[#allocation8 + $0x50c] sm:$0xf]
        %v546 = vld [vmem:[#allocation8 + $0x510] sm:$0xff]
        %v547 = vld [vmem:[#allocation8 + $0x518] sm:$0xf]
        %v548 = vld [vmem:[#allocation8 + $0x51c] sm:$0xff]
        %v549 = vld [vmem:[#allocation8 + $0x524] sm:$0xf]
        %v550 = vld [vmem:[#allocation8 + $0x528] sm:$0xff]
        %v551 = vld [vmem:[#allocation8 + $0x530] sm:$0xf]
        %v552 = vld [vmem:[#allocation8 + $0x534] sm:$0xff]
        %v553 = vld [vmem:[#allocation8 + $0x53c] sm:$0xf]
        %v554 = vld [vmem:[#allocation8 + $0x540] sm:$0xff]
        %v555 = vld [vmem:[#allocation8 + $0x548] sm:$0xf]
        %v556 = vld [vmem:[#allocation8 + $0x54c] sm:$0xff]
        %v557 = vld [vmem:[#allocation8 + $0x554] sm:$0xf]
        %v558 = vld [vmem:[#allocation8 + $0x558] sm:$0xff]
        %v559 = vld [vmem:[#allocation8 + $0x560] sm:$0xf]
        %v560 = vld [vmem:[#allocation8 + $0x564] sm:$0xff]
        %v561 = vld [vmem:[#allocation8 + $0x56c] sm:$0xf]
        %v562 = vld [vmem:[#allocation8 + $0x570] sm:$0xff]
        %v563 = vld [vmem:[#allocation8 + $0x578] sm:$0xf]
        %v564 = vld [vmem:[#allocation8 + $0x57c] sm:$0xff]
        %v565 = vld [vmem:[#allocation8 + $0x584] sm:$0xf]
        %v566 = vld [vmem:[#allocation8 + $0x588] sm:$0xff]
        %v567 = vld [vmem:[#allocation8 + $0x590] sm:$0xf]
        %v568 = vld [vmem:[#allocation8 + $0x594] sm:$0xff]
        %v569 = vld [vmem:[#allocation8 + $0x59c] sm:$0xf]
        %v570 = vld [vmem:[#allocation8 + $0x5a0] sm:$0xff]
        %v571 = vld [vmem:[#allocation8 + $0x5a8] sm:$0xf]
        %v572 = vld [vmem:[#allocation8 + $0x5ac] sm:$0xff]
        %v573 = vld [vmem:[#allocation8 + $0x5b4] sm:$0xf]
        %v574 = vld [vmem:[#allocation8 + $0x5b8] sm:$0xff]
        %v575 = vld [vmem:[#allocation8 + $0x5c0] sm:$0xf]
        %v576 = vld [vmem:[#allocation8 + $0x5c4] sm:$0xff]
        %v577 = vld [vmem:[#allocation8 + $0x5cc] sm:$0xf]
        %v578 = vld [vmem:[#allocation8 + $0x5d0] sm:$0xff]
        %v579 = vld [vmem:[#allocation8 + $0x5d8] sm:$0xf]
        %v580 = vld [vmem:[#allocation8 + $0x5dc] sm:$0xff]
        %v581 = vld [vmem:[#allocation8 + $0x5e4] sm:$0xf]
        %v582 = vld [vmem:[#allocation8 + $0x5e8] sm:$0xff]
        %v583 = vld [vmem:[#allocation8 + $0x5f0] sm:$0xf]
        %v584 = vld [vmem:[#allocation8 + $0x5f4] sm:$0xff]
        %v585 = vld [vmem:[#allocation8 + $0x5fc] sm:$0xf]
        %v590 = vunpack.c.l.b16 %v326
        %v591 = vunpack.c.h.b16 %v326
        %v592 = vunpack.c.l.b16 %v327
        %v593 = vunpack.c.h.b16 %v327
        %v594 = vunpack.c.l.b16 %v328
        %v595 = vunpack.c.h.b16 %v328
        %v596 = vunpack.c.l.b16 %v329
        %v597 = vunpack.c.h.b16 %v329
        %v598 = vpack.c.b16 %v590, %v590
        %v599 = vpack.c.b16 %v591, %v591
        %v600 = vpack.c.b16 %v592, %v592
        %v601 = vpack.c.b16 %v593, %v593
        %v602 = vpack.c.b16 %v594, %v594
        %v603 = vpack.c.b16 %v595, %v595
        %v604 = vpack.c.b16 %v596, %v596
        %v605 = vpack.c.b16 %v597, %v597
        %v870 = vunpack.c.l.b16 %v330
        %v871 = vunpack.c.h.b16 %v330
        %v872 = vunpack.c.l.b16 %v331
        %v873 = vunpack.c.l.b16 %v332
        %v874 = vunpack.c.h.b16 %v332
        %v875 = vunpack.c.l.b16 %v333
        %v876 = vunpack.c.l.b16 %v334
        %v877 = vunpack.c.h.b16 %v334
        %v878 = vunpack.c.l.b16 %v335
        %v879 = vunpack.c.l.b16 %v336
        %v880 = vunpack.c.h.b16 %v336
        %v881 = vunpack.c.l.b16 %v337
        %v882 = vunpack.c.l.b16 %v338
        %v883 = vunpack.c.h.b16 %v338
        %v884 = vunpack.c.l.b16 %v339
        %v885 = vunpack.c.l.b16 %v340
        %v886 = vunpack.c.h.b16 %v340
        %v887 = vunpack.c.l.b16 %v341
        %v888 = vunpack.c.l.b16 %v342
        %v889 = vunpack.c.h.b16 %v342
        %v890 = vunpack.c.l.b16 %v343
        %v891 = vunpack.c.l.b16 %v344
        %v892 = vunpack.c.h.b16 %v344
        %v893 = vunpack.c.l.b16 %v345
        %v894 = vunpack.c.l.b16 %v346
        %v895 = vunpack.c.h.b16 %v346
        %v896 = vunpack.c.l.b16 %v347
        %v897 = vunpack.c.l.b16 %v348
        %v898 = vunpack.c.h.b16 %v348
        %v899 = vunpack.c.l.b16 %v349
        %v900 = vunpack.c.l.b16 %v350
        %v901 = vunpack.c.h.b16 %v350
        %v902 = vunpack.c.l.b16 %v351
        %v903 = vunpack.c.l.b16 %v352
        %v904 = vunpack.c.h.b16 %v352
        %v905 = vunpack.c.l.b16 %v353
        %v906 = vunpack.c.l.b16 %v354
        %v907 = vunpack.c.h.b16 %v354
        %v908 = vunpack.c.l.b16 %v355
        %v909 = vunpack.c.l.b16 %v356
        %v910 = vunpack.c.h.b16 %v356
        %v911 = vunpack.c.l.b16 %v357
        %v912 = vunpack.c.l.b16 %v358
        %v913 = vunpack.c.h.b16 %v358
        %v914 = vunpack.c.l.b16 %v359
        %v915 = vunpack.c.l.b16 %v360
        %v916 = vunpack.c.h.b16 %v360
        %v917 = vunpack.c.l.b16 %v361
        %v918 = vunpack.c.l.b16 %v362
        %v919 = vunpack.c.h.b16 %v362
        %v920 = vunpack.c.l.b16 %v363
        %v921 = vunpack.c.l.b16 %v364
        %v922 = vunpack.c.h.b16 %v364
        %v923 = vunpack.c.l.b16 %v365
        %v924 = vunpack.c.l.b16 %v366
        %v925 = vunpack.c.h.b16 %v366
        %v926 = vunpack.c.l.b16 %v367
        %v927 = vunpack.c.l.b16 %v368
        %v928 = vunpack.c.h.b16 %v368
        %v929 = vunpack.c.l.b16 %v369
        %v930 = vunpack.c.l.b16 %v370
        %v931 = vunpack.c.h.b16 %v370
        %v932 = vunpack.c.l.b16 %v371
        %v933 = vunpack.c.l.b16 %v372
        %v934 = vunpack.c.h.b16 %v372
        %v935 = vunpack.c.l.b16 %v373
        %v936 = vunpack.c.l.b16 %v374
        %v937 = vunpack.c.h.b16 %v374
        %v938 = vunpack.c.l.b16 %v375
        %v939 = vunpack.c.l.b16 %v376
        %v940 = vunpack.c.h.b16 %v376
        %v941 = vunpack.c.l.b16 %v377
        %v942 = vunpack.c.l.b16 %v378
        %v943 = vunpack.c.h.b16 %v378
        %v944 = vunpack.c.l.b16 %v379
        %v945 = vunpack.c.l.b16 %v380
        %v946 = vunpack.c.h.b16 %v380
        %v947 = vunpack.c.l.b16 %v381
        %v948 = vunpack.c.l.b16 %v382
        %v949 = vunpack.c.h.b16 %v382
        %v950 = vunpack.c.l.b16 %v383
        %v951 = vunpack.c.l.b16 %v384
        %v952 = vunpack.c.h.b16 %v384
        %v953 = vunpack.c.l.b16 %v385
        %v954 = vunpack.c.l.b16 %v386
        %v955 = vunpack.c.h.b16 %v386
        %v956 = vunpack.c.l.b16 %v387
        %v957 = vunpack.c.l.b16 %v388
        %v958 = vunpack.c.h.b16 %v388
        %v959 = vunpack.c.l.b16 %v389
        %v960 = vunpack.c.l.b16 %v390
        %v961 = vunpack.c.h.b16 %v390
        %v962 = vunpack.c.l.b16 %v391
        %v963 = vunpack.c.l.b16 %v392
        %v964 = vunpack.c.h.b16 %v392
        %v965 = vunpack.c.l.b16 %v393
        %v966 = vunpack.c.l.b16 %v394
        %v967 = vunpack.c.h.b16 %v394
        %v968 = vunpack.c.l.b16 %v395
        %v969 = vunpack.c.l.b16 %v396
        %v970 = vunpack.c.h.b16 %v396
        %v971 = vunpack.c.l.b16 %v397
        %v972 = vunpack.c.l.b16 %v398
        %v973 = vunpack.c.h.b16 %v398
        %v974 = vunpack.c.l.b16 %v399
        %v975 = vunpack.c.l.b16 %v400
        %v976 = vunpack.c.h.b16 %v400
        %v977 = vunpack.c.l.b16 %v401
        %v978 = vunpack.c.l.b16 %v402
        %v979 = vunpack.c.h.b16 %v402
        %v980 = vunpack.c.l.b16 %v403
        %v981 = vunpack.c.l.b16 %v404
        %v982 = vunpack.c.h.b16 %v404
        %v983 = vunpack.c.l.b16 %v405
        %v984 = vunpack.c.l.b16 %v406
        %v985 = vunpack.c.h.b16 %v406
        %v986 = vunpack.c.l.b16 %v407
        %v987 = vunpack.c.l.b16 %v408
        %v988 = vunpack.c.h.b16 %v408
        %v989 = vunpack.c.l.b16 %v409
        %v990 = vunpack.c.l.b16 %v410
        %v991 = vunpack.c.h.b16 %v410
        %v992 = vunpack.c.l.b16 %v411
        %v993 = vunpack.c.l.b16 %v412
        %v994 = vunpack.c.h.b16 %v412
        %v995 = vunpack.c.l.b16 %v413
        %v996 = vunpack.c.l.b16 %v414
        %v997 = vunpack.c.h.b16 %v414
        %v998 = vunpack.c.l.b16 %v415
        %v999 = vunpack.c.l.b16 %v416
        %v1000 = vunpack.c.h.b16 %v416
        %v1001 = vunpack.c.l.b16 %v417
        %v1002 = vunpack.c.l.b16 %v418
        %v1003 = vunpack.c.h.b16 %v418
        %v1004 = vunpack.c.l.b16 %v419
        %v1005 = vunpack.c.l.b16 %v420
        %v1006 = vunpack.c.h.b16 %v420
        %v1007 = vunpack.c.l.b16 %v421
        %v1008 = vunpack.c.l.b16 %v422
        %v1009 = vunpack.c.h.b16 %v422
        %v1010 = vunpack.c.l.b16 %v423
        %v1011 = vunpack.c.l.b16 %v424
        %v1012 = vunpack.c.h.b16 %v424
        %v1013 = vunpack.c.l.b16 %v425
        %v1014 = vunpack.c.l.b16 %v426
        %v1015 = vunpack.c.h.b16 %v426
        %v1016 = vunpack.c.l.b16 %v427
        %v1017 = vunpack.c.l.b16 %v428
        %v1018 = vunpack.c.h.b16 %v428
        %v1019 = vunpack.c.l.b16 %v429
        %v1020 = vunpack.c.l.b16 %v430
        %v1021 = vunpack.c.h.b16 %v430
        %v1022 = vunpack.c.l.b16 %v431
        %v1023 = vunpack.c.l.b16 %v432
        %v1024 = vunpack.c.h.b16 %v432
        %v1025 = vunpack.c.l.b16 %v433
        %v1026 = vunpack.c.l.b16 %v434
        %v1027 = vunpack.c.h.b16 %v434
        %v1028 = vunpack.c.l.b16 %v435
        %v1029 = vunpack.c.l.b16 %v436
        %v1030 = vunpack.c.h.b16 %v436
        %v1031 = vunpack.c.l.b16 %v437
        %v1032 = vunpack.c.l.b16 %v438
        %v1033 = vunpack.c.h.b16 %v438
        %v1034 = vunpack.c.l.b16 %v439
        %v1035 = vunpack.c.l.b16 %v440
        %v1036 = vunpack.c.h.b16 %v440
        %v1037 = vunpack.c.l.b16 %v441
        %v1038 = vunpack.c.l.b16 %v442
        %v1039 = vunpack.c.h.b16 %v442
        %v1040 = vunpack.c.l.b16 %v443
        %v1041 = vunpack.c.l.b16 %v444
        %v1042 = vunpack.c.h.b16 %v444
        %v1043 = vunpack.c.l.b16 %v445
        %v1044 = vunpack.c.l.b16 %v446
        %v1045 = vunpack.c.h.b16 %v446
        %v1046 = vunpack.c.l.b16 %v447
        %v1047 = vunpack.c.l.b16 %v448
        %v1048 = vunpack.c.h.b16 %v448
        %v1049 = vunpack.c.l.b16 %v449
        %v1050 = vunpack.c.l.b16 %v450
        %v1051 = vunpack.c.h.b16 %v450
        %v1052 = vunpack.c.l.b16 %v451
        %v1053 = vunpack.c.l.b16 %v452
        %v1054 = vunpack.c.h.b16 %v452
        %v1055 = vunpack.c.l.b16 %v453
        %v1056 = vunpack.c.l.b16 %v454
        %v1057 = vunpack.c.h.b16 %v454
        %v1058 = vunpack.c.l.b16 %v455
        %v1059 = vunpack.c.l.b16 %v456
        %v1060 = vunpack.c.h.b16 %v456
        %v1061 = vunpack.c.l.b16 %v457
        %v1062 = vunpack.c.l.b16 %v458
        %v1063 = vunpack.c.h.b16 %v458
        %v1064 = vunpack.c.l.b16 %v459
        %v1065 = vunpack.c.l.b16 %v460
        %v1066 = vunpack.c.h.b16 %v460
        %v1067 = vunpack.c.l.b16 %v461
        %v1068 = vunpack.c.l.b16 %v462
        %v1069 = vunpack.c.h.b16 %v462
        %v1070 = vunpack.c.l.b16 %v463
        %v1071 = vunpack.c.l.b16 %v464
        %v1072 = vunpack.c.h.b16 %v464
        %v1073 = vunpack.c.l.b16 %v465
        %v1074 = vunpack.c.l.b16 %v466
        %v1075 = vunpack.c.h.b16 %v466
        %v1076 = vunpack.c.l.b16 %v467
        %v1077 = vunpack.c.l.b16 %v468
        %v1078 = vunpack.c.h.b16 %v468
        %v1079 = vunpack.c.l.b16 %v469
        %v1080 = vunpack.c.l.b16 %v470
        %v1081 = vunpack.c.h.b16 %v470
        %v1082 = vunpack.c.l.b16 %v471
        %v1083 = vunpack.c.l.b16 %v472
        %v1084 = vunpack.c.h.b16 %v472
        %v1085 = vunpack.c.l.b16 %v473
        %v1086 = vunpack.c.l.b16 %v474
        %v1087 = vunpack.c.h.b16 %v474
        %v1088 = vunpack.c.l.b16 %v475
        %v1089 = vunpack.c.l.b16 %v476
        %v1090 = vunpack.c.h.b16 %v476
        %v1091 = vunpack.c.l.b16 %v477
        %v1092 = vunpack.c.l.b16 %v478
        %v1093 = vunpack.c.h.b16 %v478
        %v1094 = vunpack.c.l.b16 %v479
        %v1095 = vunpack.c.l.b16 %v480
        %v1096 = vunpack.c.h.b16 %v480
        %v1097 = vunpack.c.l.b16 %v481
        %v1098 = vunpack.c.l.b16 %v482
        %v1099 = vunpack.c.h.b16 %v482
        %v1100 = vunpack.c.l.b16 %v483
        %v1101 = vunpack.c.l.b16 %v484
        %v1102 = vunpack.c.h.b16 %v484
        %v1103 = vunpack.c.l.b16 %v485
        %v1104 = vunpack.c.l.b16 %v486
        %v1105 = vunpack.c.h.b16 %v486
        %v1106 = vunpack.c.l.b16 %v487
        %v1107 = vunpack.c.l.b16 %v488
        %v1108 = vunpack.c.h.b16 %v488
        %v1109 = vunpack.c.l.b16 %v489
        %v1110 = vunpack.c.l.b16 %v490
        %v1111 = vunpack.c.h.b16 %v490
        %v1112 = vunpack.c.l.b16 %v491
        %v1113 = vunpack.c.l.b16 %v492
        %v1114 = vunpack.c.h.b16 %v492
        %v1115 = vunpack.c.l.b16 %v493
        %v1116 = vunpack.c.l.b16 %v494
        %v1117 = vunpack.c.h.b16 %v494
        %v1118 = vunpack.c.l.b16 %v495
        %v1119 = vunpack.c.l.b16 %v496
        %v1120 = vunpack.c.h.b16 %v496
        %v1121 = vunpack.c.l.b16 %v497
        %v1122 = vunpack.c.l.b16 %v498
        %v1123 = vunpack.c.h.b16 %v498
        %v1124 = vunpack.c.l.b16 %v499
        %v1125 = vunpack.c.l.b16 %v500
        %v1126 = vunpack.c.h.b16 %v500
        %v1127 = vunpack.c.l.b16 %v501
        %v1128 = vunpack.c.l.b16 %v502
        %v1129 = vunpack.c.h.b16 %v502
        %v1130 = vunpack.c.l.b16 %v503
        %v1131 = vunpack.c.l.b16 %v504
        %v1132 = vunpack.c.h.b16 %v504
        %v1133 = vunpack.c.l.b16 %v505
        %v1134 = vunpack.c.l.b16 %v506
        %v1135 = vunpack.c.h.b16 %v506
        %v1136 = vunpack.c.l.b16 %v507
        %v1137 = vunpack.c.l.b16 %v508
        %v1138 = vunpack.c.h.b16 %v508
        %v1139 = vunpack.c.l.b16 %v509
        %v1140 = vunpack.c.l.b16 %v510
        %v1141 = vunpack.c.h.b16 %v510
        %v1142 = vunpack.c.l.b16 %v511
        %v1143 = vunpack.c.l.b16 %v512
        %v1144 = vunpack.c.h.b16 %v512
        %v1145 = vunpack.c.l.b16 %v513
        %v1146 = vunpack.c.l.b16 %v514
        %v1147 = vunpack.c.h.b16 %v514
        %v1148 = vunpack.c.l.b16 %v515
        %v1149 = vunpack.c.l.b16 %v516
        %v1150 = vunpack.c.h.b16 %v516
        %v1151 = vunpack.c.l.b16 %v517
        %v1152 = vunpack.c.l.b16 %v518
        %v1153 = vunpack.c.h.b16 %v518
        %v1154 = vunpack.c.l.b16 %v519
        %v1155 = vunpack.c.l.b16 %v520
        %v1156 = vunpack.c.h.b16 %v520
        %v1157 = vunpack.c.l.b16 %v521
        %v1158 = vunpack.c.l.b16 %v522
        %v1159 = vunpack.c.h.b16 %v522
        %v1160 = vunpack.c.l.b16 %v523
        %v1161 = vunpack.c.l.b16 %v524
        %v1162 = vunpack.c.h.b16 %v524
        %v1163 = vunpack.c.l.b16 %v525
        %v1164 = vunpack.c.l.b16 %v526
        %v1165 = vunpack.c.h.b16 %v526
        %v1166 = vunpack.c.l.b16 %v527
        %v1167 = vunpack.c.l.b16 %v528
        %v1168 = vunpack.c.h.b16 %v528
        %v1169 = vunpack.c.l.b16 %v529
        %v1170 = vunpack.c.l.b16 %v530
        %v1171 = vunpack.c.h.b16 %v530
        %v1172 = vunpack.c.l.b16 %v531
        %v1173 = vunpack.c.l.b16 %v532
        %v1174 = vunpack.c.h.b16 %v532
        %v1175 = vunpack.c.l.b16 %v533
        %v1176 = vunpack.c.l.b16 %v534
        %v1177 = vunpack.c.h.b16 %v534
        %v1178 = vunpack.c.l.b16 %v535
        %v1179 = vunpack.c.l.b16 %v536
        %v1180 = vunpack.c.h.b16 %v536
        %v1181 = vunpack.c.l.b16 %v537
        %v1182 = vunpack.c.l.b16 %v538
        %v1183 = vunpack.c.h.b16 %v538
        %v1184 = vunpack.c.l.b16 %v539
        %v1185 = vunpack.c.l.b16 %v540
        %v1186 = vunpack.c.h.b16 %v540
        %v1187 = vunpack.c.l.b16 %v541
        %v1188 = vunpack.c.l.b16 %v542
        %v1189 = vunpack.c.h.b16 %v542
        %v1190 = vunpack.c.l.b16 %v543
        %v1191 = vunpack.c.l.b16 %v544
        %v1192 = vunpack.c.h.b16 %v544
        %v1193 = vunpack.c.l.b16 %v545
        %v1194 = vunpack.c.l.b16 %v546
        %v1195 = vunpack.c.h.b16 %v546
        %v1196 = vunpack.c.l.b16 %v547
        %v1197 = vunpack.c.l.b16 %v548
        %v1198 = vunpack.c.h.b16 %v548
        %v1199 = vunpack.c.l.b16 %v549
        %v1200 = vunpack.c.l.b16 %v550
        %v1201 = vunpack.c.h.b16 %v550
        %v1202 = vunpack.c.l.b16 %v551
        %v1203 = vunpack.c.l.b16 %v552
        %v1204 = vunpack.c.h.b16 %v552
        %v1205 = vunpack.c.l.b16 %v553
        %v1206 = vunpack.c.l.b16 %v554
        %v1207 = vunpack.c.h.b16 %v554
        %v1208 = vunpack.c.l.b16 %v555
        %v1209 = vunpack.c.l.b16 %v556
        %v1210 = vunpack.c.h.b16 %v556
        %v1211 = vunpack.c.l.b16 %v557
        %v1212 = vunpack.c.l.b16 %v558
        %v1213 = vunpack.c.h.b16 %v558
        %v1214 = vunpack.c.l.b16 %v559
        %v1215 = vunpack.c.l.b16 %v560
        %v1216 = vunpack.c.h.b16 %v560
        %v1217 = vunpack.c.l.b16 %v561
        %v1218 = vunpack.c.l.b16 %v562
        %v1219 = vunpack.c.h.b16 %v562
        %v1220 = vunpack.c.l.b16 %v563
        %v1221 = vunpack.c.l.b16 %v564
        %v1222 = vunpack.c.h.b16 %v564
        %v1223 = vunpack.c.l.b16 %v565
        %v1224 = vunpack.c.l.b16 %v566
        %v1225 = vunpack.c.h.b16 %v566
        %v1226 = vunpack.c.l.b16 %v567
        %v1227 = vunpack.c.l.b16 %v568
        %v1228 = vunpack.c.h.b16 %v568
        %v1229 = vunpack.c.l.b16 %v569
        %v1230 = vunpack.c.l.b16 %v570
        %v1231 = vunpack.c.h.b16 %v570
        %v1232 = vunpack.c.l.b16 %v571
        %v1233 = vunpack.c.l.b16 %v572
        %v1234 = vunpack.c.h.b16 %v572
        %v1235 = vunpack.c.l.b16 %v573
        %v1236 = vunpack.c.l.b16 %v574
        %v1237 = vunpack.c.h.b16 %v574
        %v1238 = vunpack.c.l.b16 %v575
        %v1239 = vunpack.c.l.b16 %v576
        %v1240 = vunpack.c.h.b16 %v576
        %v1241 = vunpack.c.l.b16 %v577
        %v1242 = vunpack.c.l.b16 %v578
        %v1243 = vunpack.c.h.b16 %v578
        %v1244 = vunpack.c.l.b16 %v579
        %v1245 = vunpack.c.l.b16 %v580
        %v1246 = vunpack.c.h.b16 %v580
        %v1247 = vunpack.c.l.b16 %v581
        %v1248 = vunpack.c.l.b16 %v582
        %v1249 = vunpack.c.h.b16 %v582
        %v1250 = vunpack.c.l.b16 %v583
        %v1251 = vunpack.c.l.b16 %v584
        %v1252 = vunpack.c.h.b16 %v584
        %v1253 = vunpack.c.l.b16 %v585
        %v1254 = vpack.c.b16 %v873, %v870
        %v1255 = vpack.c.b16 %v874, %v871
        %v1256 = vpack.c.b16 %v875, %v872
        %v1257 = vpack.c.b16 %v879, %v876
        %v1258 = vpack.c.b16 %v880, %v877
        %v1259 = vpack.c.b16 %v881, %v878
        %v1260 = vpack.c.b16 %v885, %v882
        %v1261 = vpack.c.b16 %v886, %v883
        %v1262 = vpack.c.b16 %v887, %v884
        %v1263 = vpack.c.b16 %v891, %v888
        %v1264 = vpack.c.b16 %v892, %v889
        %v1265 = vpack.c.b16 %v893, %v890
        %v1266 = vpack.c.b16 %v897, %v894
        %v1267 = vpack.c.b16 %v898, %v895
        %v1268 = vpack.c.b16 %v899, %v896
        %v1269 = vpack.c.b16 %v903, %v900
        %v1270 = vpack.c.b16 %v904, %v901
        %v1271 = vpack.c.b16 %v905, %v902
        %v1272 = vpack.c.b16 %v909, %v906
        %v1273 = vpack.c.b16 %v910, %v907
        %v1274 = vpack.c.b16 %v911, %v908
        %v1275 = vpack.c.b16 %v915, %v912
        %v1276 = vpack.c.b16 %v916, %v913
        %v1277 = vpack.c.b16 %v917, %v914
        %v1278 = vpack.c.b16 %v921, %v918
        %v1279 = vpack.c.b16 %v922, %v919
        %v1280 = vpack.c.b16 %v923, %v920
        %v1281 = vpack.c.b16 %v927, %v924
        %v1282 = vpack.c.b16 %v928, %v925
        %v1283 = vpack.c.b16 %v929, %v926
        %v1284 = vpack.c.b16 %v933, %v930
        %v1285 = vpack.c.b16 %v934, %v931
        %v1286 = vpack.c.b16 %v935, %v932
        %v1287 = vpack.c.b16 %v939, %v936
        %v1288 = vpack.c.b16 %v940, %v937
        %v1289 = vpack.c.b16 %v941, %v938
        %v1290 = vpack.c.b16 %v945, %v942
        %v1291 = vpack.c.b16 %v946, %v943
        %v1292 = vpack.c.b16 %v947, %v944
        %v1293 = vpack.c.b16 %v951, %v948
        %v1294 = vpack.c.b16 %v952, %v949
        %v1295 = vpack.c.b16 %v953, %v950
        %v1296 = vpack.c.b16 %v957, %v954
        %v1297 = vpack.c.b16 %v958, %v955
        %v1298 = vpack.c.b16 %v959, %v956
        %v1299 = vpack.c.b16 %v963, %v960
        %v1300 = vpack.c.b16 %v964, %v961
        %v1301 = vpack.c.b16 %v965, %v962
        %v1302 = vpack.c.b16 %v969, %v966
        %v1303 = vpack.c.b16 %v970, %v967
        %v1304 = vpack.c.b16 %v971, %v968
        %v1305 = vpack.c.b16 %v975, %v972
        %v1306 = vpack.c.b16 %v976, %v973
        %v1307 = vpack.c.b16 %v977, %v974
        %v1308 = vpack.c.b16 %v981, %v978
        %v1309 = vpack.c.b16 %v982, %v979
        %v1310 = vpack.c.b16 %v983, %v980
        %v1311 = vpack.c.b16 %v987, %v984
        %v1312 = vpack.c.b16 %v988, %v985
        %v1313 = vpack.c.b16 %v989, %v986
        %v1314 = vpack.c.b16 %v993, %v990
        %v1315 = vpack.c.b16 %v994, %v991
        %v1316 = vpack.c.b16 %v995, %v992
        %v1317 = vpack.c.b16 %v999, %v996
        %v1318 = vpack.c.b16 %v1000, %v997
        %v1319 = vpack.c.b16 %v1001, %v998
        %v1320 = vpack.c.b16 %v1005, %v1002
        %v1321 = vpack.c.b16 %v1006, %v1003
        %v1322 = vpack.c.b16 %v1007, %v1004
        %v1323 = vpack.c.b16 %v1011, %v1008
        %v1324 = vpack.c.b16 %v1012, %v1009
        %v1325 = vpack.c.b16 %v1013, %v1010
        %v1326 = vpack.c.b16 %v1017, %v1014
        %v1327 = vpack.c.b16 %v1018, %v1015
        %v1328 = vpack.c.b16 %v1019, %v1016
        %v1329 = vpack.c.b16 %v1023, %v1020
        %v1330 = vpack.c.b16 %v1024, %v1021
        %v1331 = vpack.c.b16 %v1025, %v1022
        %v1332 = vpack.c.b16 %v1029, %v1026
        %v1333 = vpack.c.b16 %v1030, %v1027
        %v1334 = vpack.c.b16 %v1031, %v1028
        %v1335 = vpack.c.b16 %v1035, %v1032
        %v1336 = vpack.c.b16 %v1036, %v1033
        %v1337 = vpack.c.b16 %v1037, %v1034
        %v1338 = vpack.c.b16 %v1041, %v1038
        %v1339 = vpack.c.b16 %v1042, %v1039
        %v1340 = vpack.c.b16 %v1043, %v1040
        %v1341 = vpack.c.b16 %v1047, %v1044
        %v1342 = vpack.c.b16 %v1048, %v1045
        %v1343 = vpack.c.b16 %v1049, %v1046
        %v1344 = vpack.c.b16 %v1053, %v1050
        %v1345 = vpack.c.b16 %v1054, %v1051
        %v1346 = vpack.c.b16 %v1055, %v1052
        %v1347 = vpack.c.b16 %v1059, %v1056
        %v1348 = vpack.c.b16 %v1060, %v1057
        %v1349 = vpack.c.b16 %v1061, %v1058
        %v1350 = vpack.c.b16 %v1065, %v1062
        %v1351 = vpack.c.b16 %v1066, %v1063
        %v1352 = vpack.c.b16 %v1067, %v1064
        %v1353 = vpack.c.b16 %v1071, %v1068
        %v1354 = vpack.c.b16 %v1072, %v1069
        %v1355 = vpack.c.b16 %v1073, %v1070
        %v1356 = vpack.c.b16 %v1077, %v1074
        %v1357 = vpack.c.b16 %v1078, %v1075
        %v1358 = vpack.c.b16 %v1079, %v1076
        %v1359 = vpack.c.b16 %v1083, %v1080
        %v1360 = vpack.c.b16 %v1084, %v1081
        %v1361 = vpack.c.b16 %v1085, %v1082
        %v1362 = vpack.c.b16 %v1089, %v1086
        %v1363 = vpack.c.b16 %v1090, %v1087
        %v1364 = vpack.c.b16 %v1091, %v1088
        %v1365 = vpack.c.b16 %v1095, %v1092
        %v1366 = vpack.c.b16 %v1096, %v1093
        %v1367 = vpack.c.b16 %v1097, %v1094
        %v1368 = vpack.c.b16 %v1101, %v1098
        %v1369 = vpack.c.b16 %v1102, %v1099
        %v1370 = vpack.c.b16 %v1103, %v1100
        %v1371 = vpack.c.b16 %v1107, %v1104
        %v1372 = vpack.c.b16 %v1108, %v1105
        %v1373 = vpack.c.b16 %v1109, %v1106
        %v1374 = vpack.c.b16 %v1113, %v1110
        %v1375 = vpack.c.b16 %v1114, %v1111
        %v1376 = vpack.c.b16 %v1115, %v1112
        %v1377 = vpack.c.b16 %v1119, %v1116
        %v1378 = vpack.c.b16 %v1120, %v1117
        %v1379 = vpack.c.b16 %v1121, %v1118
        %v1380 = vpack.c.b16 %v1125, %v1122
        %v1381 = vpack.c.b16 %v1126, %v1123
        %v1382 = vpack.c.b16 %v1127, %v1124
        %v1383 = vpack.c.b16 %v1131, %v1128
        %v1384 = vpack.c.b16 %v1132, %v1129
        %v1385 = vpack.c.b16 %v1133, %v1130
        %v1386 = vpack.c.b16 %v1137, %v1134
        %v1387 = vpack.c.b16 %v1138, %v1135
        %v1388 = vpack.c.b16 %v1139, %v1136
        %v1389 = vpack.c.b16 %v1143, %v1140
        %v1390 = vpack.c.b16 %v1144, %v1141
        %v1391 = vpack.c.b16 %v1145, %v1142
        %v1392 = vpack.c.b16 %v1149, %v1146
        %v1393 = vpack.c.b16 %v1150, %v1147
        %v1394 = vpack.c.b16 %v1151, %v1148
        %v1395 = vpack.c.b16 %v1155, %v1152
        %v1396 = vpack.c.b16 %v1156, %v1153
        %v1397 = vpack.c.b16 %v1157, %v1154
        %v1398 = vpack.c.b16 %v1161, %v1158
        %v1399 = vpack.c.b16 %v1162, %v1159
        %v1400 = vpack.c.b16 %v1163, %v1160
        %v1401 = vpack.c.b16 %v1167, %v1164
        %v1402 = vpack.c.b16 %v1168, %v1165
        %v1403 = vpack.c.b16 %v1169, %v1166
        %v1404 = vpack.c.b16 %v1173, %v1170
        %v1405 = vpack.c.b16 %v1174, %v1171
        %v1406 = vpack.c.b16 %v1175, %v1172
        %v1407 = vpack.c.b16 %v1179, %v1176
        %v1408 = vpack.c.b16 %v1180, %v1177
        %v1409 = vpack.c.b16 %v1181, %v1178
        %v1410 = vpack.c.b16 %v1185, %v1182
        %v1411 = vpack.c.b16 %v1186, %v1183
        %v1412 = vpack.c.b16 %v1187, %v1184
        %v1413 = vpack.c.b16 %v1191, %v1188
        %v1414 = vpack.c.b16 %v1192, %v1189
        %v1415 = vpack.c.b16 %v1193, %v1190
        %v1416 = vpack.c.b16 %v1197, %v1194
        %v1417 = vpack.c.b16 %v1198, %v1195
        %v1418 = vpack.c.b16 %v1199, %v1196
        %v1419 = vpack.c.b16 %v1203, %v1200
        %v1420 = vpack.c.b16 %v1204, %v1201
        %v1421 = vpack.c.b16 %v1205, %v1202
        %v1422 = vpack.c.b16 %v1209, %v1206
        %v1423 = vpack.c.b16 %v1210, %v1207
        %v1424 = vpack.c.b16 %v1211, %v1208
        %v1425 = vpack.c.b16 %v1215, %v1212
        %v1426 = vpack.c.b16 %v1216, %v1213
        %v1427 = vpack.c.b16 %v1217, %v1214
        %v1428 = vpack.c.b16 %v1221, %v1218
        %v1429 = vpack.c.b16 %v1222, %v1219
        %v1430 = vpack.c.b16 %v1223, %v1220
        %v1431 = vpack.c.b16 %v1227, %v1224
        %v1432 = vpack.c.b16 %v1228, %v1225
        %v1433 = vpack.c.b16 %v1229, %v1226
        %v1434 = vpack.c.b16 %v1233, %v1230
        %v1435 = vpack.c.b16 %v1234, %v1231
        %v1436 = vpack.c.b16 %v1235, %v1232
        %v1437 = vpack.c.b16 %v1239, %v1236
        %v1438 = vpack.c.b16 %v1240, %v1237
        %v1439 = vpack.c.b16 %v1241, %v1238
        %v1440 = vpack.c.b16 %v1245, %v1242
        %v1441 = vpack.c.b16 %v1246, %v1243
        %v1442 = vpack.c.b16 %v1247, %v1244
        %v1443 = vpack.c.b16 %v1251, %v1248
        %v1444 = vpack.c.b16 %v1252, %v1249
        %v1445 = vpack.c.b16 %v1253, %v1250
        %1638 = vmatprep.subr.bf16.mxu0 %v1276
        %1639 = vmatpush1.bf16.msra.mxu0 %v1275
        %1640 = vmatprep.subr.bf16.mxu0 %v1273
        %1641 = vmatpush1.bf16.msra.mxu0 %v1272
        %1642 = vmatprep.subr.bf16.mxu0 %v1270
        %1643 = vmatpush1.bf16.msra.mxu0 %v1269
        %1644 = vmatprep.subr.bf16.mxu0 %v1267
        %1645 = vmatpush1.bf16.msra.mxu0 %v1266
        %1646 = vmatprep.subr.bf16.mxu0 %v1264
        %1647 = vmatpush1.bf16.msra.mxu0 %v1263
        %1648 = vmatprep.subr.bf16.mxu0 %v1261
        %1649 = vmatpush1.bf16.msra.mxu0 %v1260
        %1650 = vmatprep.subr.bf16.mxu0 %v1258
        %1651 = vmatpush1.bf16.msra.mxu0 %v1257
        %1652 = vmatprep.subr.bf16.mxu0 %v1255
        %1653 = vmatpush1.bf16.msra.mxu0 %v1254
        %1654 = vmatprep.subr.bf16.mxu0 %v1300
        %1655 = vmatpush2.bf16.msra.mxu0 %v1299
        %1656 = vmatprep.subr.bf16.mxu0 %v1297
        %1657 = vmatpush2.bf16.msra.mxu0 %v1296
        %1658 = vmatprep.subr.bf16.mxu0 %v1294
        %1659 = vmatpush2.bf16.msra.mxu0 %v1293
        %1660 = vmatprep.subr.bf16.mxu0 %v1291
        %1661 = vmatpush2.bf16.msra.mxu0 %v1290
        %1662 = vmatprep.subr.bf16.mxu0 %v1288
        %1663 = vmatpush2.bf16.msra.mxu0 %v1287
        %1664 = vmatprep.subr.bf16.mxu0 %v1285
        %1665 = vmatpush2.bf16.msra.mxu0 %v1284
        %1666 = vmatprep.subr.bf16.mxu0 %v1282
        %1667 = vmatpush2.bf16.msra.mxu0 %v1281
        %1668 = vmatprep.subr.bf16.mxu0 %v1279
        %1669 = vmatpush2.bf16.msra.mxu0 %v1278
        %1670 = vmatprep.mubr.bf16.mxu0 %v599
        %1671 = vmatmul.mubr.bf16.gmra.mxu0 %v598
        %v1672 = vpop.f32.mrf.mxu0
        %v1673 = vadd.f32 0.0, %v1672
        %v1674 = vpop.f32.mrf.mxu0
        %v1675 = vadd.f32 0.0, %v1674
        %v1676 = vpop.f32.mrf.mxu0
        %v1677 = vpop.f32.mrf.mxu0
        %1678 = vdwg.mxu0
        %1679 = vmatprep.subr.bf16.mxu0 %v1324
        %1680 = vmatpush1.bf16.msra.mxu0 %v1323
        %1681 = vmatprep.subr.bf16.mxu0 %v1321
        %1682 = vmatpush1.bf16.msra.mxu0 %v1320
        %1683 = vmatprep.subr.bf16.mxu0 %v1318
        %1684 = vmatpush1.bf16.msra.mxu0 %v1317
        %1685 = vmatprep.subr.bf16.mxu0 %v1315
        %1686 = vmatpush1.bf16.msra.mxu0 %v1314
        %1687 = vmatprep.subr.bf16.mxu0 %v1312
        %1688 = vmatpush1.bf16.msra.mxu0 %v1311
        %1689 = vmatprep.subr.bf16.mxu0 %v1309
        %1690 = vmatpush1.bf16.msra.mxu0 %v1308
        %1691 = vmatprep.subr.bf16.mxu0 %v1306
        %1692 = vmatpush1.bf16.msra.mxu0 %v1305
        %1693 = vmatprep.subr.bf16.mxu0 %v1303
        %1694 = vmatpush1.bf16.msra.mxu0 %v1302
        %1695 = vmatprep.subr.bf16.mxu0 %v1348
        %1696 = vmatpush2.bf16.msra.mxu0 %v1347
        %1697 = vmatprep.subr.bf16.mxu0 %v1345
        %1698 = vmatpush2.bf16.msra.mxu0 %v1344
        %1699 = vmatprep.subr.bf16.mxu0 %v1342
        %1700 = vmatpush2.bf16.msra.mxu0 %v1341
        %1701 = vmatprep.subr.bf16.mxu0 %v1339
        %1702 = vmatpush2.bf16.msra.mxu0 %v1338
        %1703 = vmatprep.subr.bf16.mxu0 %v1336
        %1704 = vmatpush2.bf16.msra.mxu0 %v1335
        %1705 = vmatprep.subr.bf16.mxu0 %v1333
        %1706 = vmatpush2.bf16.msra.mxu0 %v1332
        %1707 = vmatprep.subr.bf16.mxu0 %v1330
        %1708 = vmatpush2.bf16.msra.mxu0 %v1329
        %1709 = vmatprep.subr.bf16.mxu0 %v1327
        %1710 = vmatpush2.bf16.msra.mxu0 %v1326
        %1711 = vmatprep.mubr.bf16.mxu0 %v601
        %1712 = vmatmul.mubr.bf16.gmra.mxu0 %v600
        %v1713 = vpop.f32.mrf.mxu0
        %v1714 = vadd.f32 %v1673, %v1713
        %v1715 = vpop.f32.mrf.mxu0
        %v1716 = vadd.f32 %v1675, %v1715
        %v1717 = vpop.f32.mrf.mxu0
        %v1718 = vpop.f32.mrf.mxu0
        %1719 = vdwg.mxu0
        %1720 = vmatprep.subr.bf16.mxu0 %v1372
        %1721 = vmatpush1.bf16.msra.mxu0 %v1371
        %1722 = vmatprep.subr.bf16.mxu0 %v1369
        %1723 = vmatpush1.bf16.msra.mxu0 %v1368
        %1724 = vmatprep.subr.bf16.mxu0 %v1366
        %1725 = vmatpush1.bf16.msra.mxu0 %v1365
        %1726 = vmatprep.subr.bf16.mxu0 %v1363
        %1727 = vmatpush1.bf16.msra.mxu0 %v1362
        %1728 = vmatprep.subr.bf16.mxu0 %v1360
        %1729 = vmatpush1.bf16.msra.mxu0 %v1359
        %1730 = vmatprep.subr.bf16.mxu0 %v1357
        %1731 = vmatpush1.bf16.msra.mxu0 %v1356
        %1732 = vmatprep.subr.bf16.mxu0 %v1354
        %1733 = vmatpush1.bf16.msra.mxu0 %v1353
        %1734 = vmatprep.subr.bf16.mxu0 %v1351
        %1735 = vmatpush1.bf16.msra.mxu0 %v1350
        %1736 = vmatprep.subr.bf16.mxu0 %v1396
        %1737 = vmatpush2.bf16.msra.mxu0 %v1395
        %1738 = vmatprep.subr.bf16.mxu0 %v1393
        %1739 = vmatpush2.bf16.msra.mxu0 %v1392
        %1740 = vmatprep.subr.bf16.mxu0 %v1390
        %1741 = vmatpush2.bf16.msra.mxu0 %v1389
        %1742 = vmatprep.subr.bf16.mxu0 %v1387
        %1743 = vmatpush2.bf16.msra.mxu0 %v1386
        %1744 = vmatprep.subr.bf16.mxu0 %v1384
        %1745 = vmatpush2.bf16.msra.mxu0 %v1383
        %1746 = vmatprep.subr.bf16.mxu0 %v1381
        %1747 = vmatpush2.bf16.msra.mxu0 %v1380
        %1748 = vmatprep.subr.bf16.mxu0 %v1378
        %1749 = vmatpush2.bf16.msra.mxu0 %v1377
        %1750 = vmatprep.subr.bf16.mxu0 %v1375
        %1751 = vmatpush2.bf16.msra.mxu0 %v1374
        %1752 = vmatprep.mubr.bf16.mxu0 %v603
        %1753 = vmatmul.mubr.bf16.gmra.mxu0 %v602
        %v1754 = vpop.f32.mrf.mxu0
        %v1755 = vadd.f32 %v1714, %v1754
        %v1756 = vpop.f32.mrf.mxu0
        %v1757 = vadd.f32 %v1716, %v1756
        %v1758 = vpop.f32.mrf.mxu0
        %v1759 = vpop.f32.mrf.mxu0
        %1760 = vdwg.mxu0
        %1761 = vmatprep.subr.bf16.mxu0 %v1420
        %1762 = vmatpush1.bf16.msra.mxu0 %v1419
        %1763 = vmatprep.subr.bf16.mxu0 %v1417
        %1764 = vmatpush1.bf16.msra.mxu0 %v1416
        %1765 = vmatprep.subr.bf16.mxu0 %v1414
        %1766 = vmatpush1.bf16.msra.mxu0 %v1413
        %1767 = vmatprep.subr.bf16.mxu0 %v1411
        %1768 = vmatpush1.bf16.msra.mxu0 %v1410
        %1769 = vmatprep.subr.bf16.mxu0 %v1408
        %1770 = vmatpush1.bf16.msra.mxu0 %v1407
        %1771 = vmatprep.subr.bf16.mxu0 %v1405
        %1772 = vmatpush1.bf16.msra.mxu0 %v1404
        %1773 = vmatprep.subr.bf16.mxu0 %v1402
        %1774 = vmatpush1.bf16.msra.mxu0 %v1401
        %1775 = vmatprep.subr.bf16.mxu0 %v1399
        %1776 = vmatpush1.bf16.msra.mxu0 %v1398
        %1777 = vmatprep.subr.bf16.mxu0 %v1444
        %1778 = vmatpush2.bf16.msra.mxu0 %v1443
        %1779 = vmatprep.subr.bf16.mxu0 %v1441
        %1780 = vmatpush2.bf16.msra.mxu0 %v1440
        %1781 = vmatprep.subr.bf16.mxu0 %v1438
        %1782 = vmatpush2.bf16.msra.mxu0 %v1437
        %1783 = vmatprep.subr.bf16.mxu0 %v1435
        %1784 = vmatpush2.bf16.msra.mxu0 %v1434
        %1785 = vmatprep.subr.bf16.mxu0 %v1432
        %1786 = vmatpush2.bf16.msra.mxu0 %v1431
        %1787 = vmatprep.subr.bf16.mxu0 %v1429
        %1788 = vmatpush2.bf16.msra.mxu0 %v1428
        %1789 = vmatprep.subr.bf16.mxu0 %v1426
        %1790 = vmatpush2.bf16.msra.mxu0 %v1425
        %1791 = vmatprep.subr.bf16.mxu0 %v1423
        %1792 = vmatpush2.bf16.msra.mxu0 %v1422
        %1793 = vmatprep.mubr.bf16.mxu0 %v605
        %1794 = vmatmul.mubr.bf16.gmra.mxu0 %v604
        %v1795 = vpop.f32.mrf.mxu0
        %v1796 = vadd.f32 %v1755, %v1795
        %v1797 = vpop.f32.mrf.mxu0
        %v1798 = vadd.f32 %v1757, %v1797
        %v1799 = vpop.f32.mrf.mxu0
        %v1800 = vpop.f32.mrf.mxu0
        %1801 = vdwg.mxu0
        %1802 = vmatprep.subr.bf16.mxu0 0
        %1803 = vmatpush1.bf16.msra.mxu0 %v1277
        %1804 = vmatprep.subr.bf16.mxu0 0
        %1805 = vmatpush1.bf16.msra.mxu0 %v1274
        %1806 = vmatprep.subr.bf16.mxu0 0
        %1807 = vmatpush1.bf16.msra.mxu0 %v1271
        %1808 = vmatprep.subr.bf16.mxu0 0
        %1809 = vmatpush1.bf16.msra.mxu0 %v1268
        %1810 = vmatprep.subr.bf16.mxu0 0
        %1811 = vmatpush1.bf16.msra.mxu0 %v1265
        %1812 = vmatprep.subr.bf16.mxu0 0
        %1813 = vmatpush1.bf16.msra.mxu0 %v1262
        %1814 = vmatprep.subr.bf16.mxu0 0
        %1815 = vmatpush1.bf16.msra.mxu0 %v1259
        %1816 = vmatprep.subr.bf16.mxu0 0
        %1817 = vmatpush1.bf16.msra.mxu0 %v1256
        %1818 = vmatprep.subr.bf16.mxu0 0
        %1819 = vmatpush2.bf16.msra.mxu0 %v1301
        %1820 = vmatprep.subr.bf16.mxu0 0
        %1821 = vmatpush2.bf16.msra.mxu0 %v1298
        %1822 = vmatprep.subr.bf16.mxu0 0
        %1823 = vmatpush2.bf16.msra.mxu0 %v1295
        %1824 = vmatprep.subr.bf16.mxu0 0
        %1825 = vmatpush2.bf16.msra.mxu0 %v1292
        %1826 = vmatprep.subr.bf16.mxu0 0
        %1827 = vmatpush2.bf16.msra.mxu0 %v1289
        %1828 = vmatprep.subr.bf16.mxu0 0
        %1829 = vmatpush2.bf16.msra.mxu0 %v1286
        %1830 = vmatprep.subr.bf16.mxu0 0
        %1831 = vmatpush2.bf16.msra.mxu0 %v1283
        %1832 = vmatprep.subr.bf16.mxu0 0
        %1833 = vmatpush2.bf16.msra.mxu0 %v1280
        %1834 = vmatprep.mubr.bf16.mxu0 %v599
        %1835 = vmatmul.mubr.bf16.gmra.mxu0 %v598
        %v1836 = vpop.f32.mrf.mxu0
        %v1837 = vadd.f32 0.0, %v1836
        %v1838 = vpop.f32.mrf.mxu0
        %v1839 = vpop.f32.mrf.mxu0
        %v1840 = vpop.f32.mrf.mxu0
        %1841 = vdwg.mxu0
        %1842 = vmatprep.subr.bf16.mxu0 0
        %1843 = vmatpush1.bf16.msra.mxu0 %v1325
        %1844 = vmatprep.subr.bf16.mxu0 0
        %1845 = vmatpush1.bf16.msra.mxu0 %v1322
        %1846 = vmatprep.subr.bf16.mxu0 0
        %1847 = vmatpush1.bf16.msra.mxu0 %v1319
        %1848 = vmatprep.subr.bf16.mxu0 0
        %1849 = vmatpush1.bf16.msra.mxu0 %v1316
        %1850 = vmatprep.subr.bf16.mxu0 0
        %1851 = vmatpush1.bf16.msra.mxu0 %v1313
        %1852 = vmatprep.subr.bf16.mxu0 0
        %1853 = vmatpush1.bf16.msra.mxu0 %v1310
        %1854 = vmatprep.subr.bf16.mxu0 0
        %1855 = vmatpush1.bf16.msra.mxu0 %v1307
        %1856 = vmatprep.subr.bf16.mxu0 0
        %1857 = vmatpush1.bf16.msra.mxu0 %v1304
        %1858 = vmatprep.subr.bf16.mxu0 0
        %1859 = vmatpush2.bf16.msra.mxu0 %v1349
        %1860 = vmatprep.subr.bf16.mxu0 0
        %1861 = vmatpush2.bf16.msra.mxu0 %v1346
        %1862 = vmatprep.subr.bf16.mxu0 0
        %1863 = vmatpush2.bf16.msra.mxu0 %v1343
        %1864 = vmatprep.subr.bf16.mxu0 0
        %1865 = vmatpush2.bf16.msra.mxu0 %v1340
        %1866 = vmatprep.subr.bf16.mxu0 0
        %1867 = vmatpush2.bf16.msra.mxu0 %v1337
        %1868 = vmatprep.subr.bf16.mxu0 0
        %1869 = vmatpush2.bf16.msra.mxu0 %v1334
        %1870 = vmatprep.subr.bf16.mxu0 0
        %1871 = vmatpush2.bf16.msra.mxu0 %v1331
        %1872 = vmatprep.subr.bf16.mxu0 0
        %1873 = vmatpush2.bf16.msra.mxu0 %v1328
        %1874 = vmatprep.mubr.bf16.mxu0 %v601
        %1875 = vmatmul.mubr.bf16.gmra.mxu0 %v600
        %v1876 = vpop.f32.mrf.mxu0
        %v1877 = vadd.f32 %v1837, %v1876
        %v1878 = vpop.f32.mrf.mxu0
        %v1879 = vpop.f32.mrf.mxu0
        %v1880 = vpop.f32.mrf.mxu0
        %1881 = vdwg.mxu0
        %1882 = vmatprep.subr.bf16.mxu0 0
        %1883 = vmatpush1.bf16.msra.mxu0 %v1373
        %1884 = vmatprep.subr.bf16.mxu0 0
        %1885 = vmatpush1.bf16.msra.mxu0 %v1370
        %1886 = vmatprep.subr.bf16.mxu0 0
        %1887 = vmatpush1.bf16.msra.mxu0 %v1367
        %1888 = vmatprep.subr.bf16.mxu0 0
        %1889 = vmatpush1.bf16.msra.mxu0 %v1364
        %1890 = vmatprep.subr.bf16.mxu0 0
        %1891 = vmatpush1.bf16.msra.mxu0 %v1361
        %1892 = vmatprep.subr.bf16.mxu0 0
        %1893 = vmatpush1.bf16.msra.mxu0 %v1358
        %1894 = vmatprep.subr.bf16.mxu0 0
        %1895 = vmatpush1.bf16.msra.mxu0 %v1355
        %1896 = vmatprep.subr.bf16.mxu0 0
        %1897 = vmatpush1.bf16.msra.mxu0 %v1352
        %1898 = vmatprep.subr.bf16.mxu0 0
        %1899 = vmatpush2.bf16.msra.mxu0 %v1397
        %1900 = vmatprep.subr.bf16.mxu0 0
        %1901 = vmatpush2.bf16.msra.mxu0 %v1394
        %1902 = vmatprep.subr.bf16.mxu0 0
        %1903 = vmatpush2.bf16.msra.mxu0 %v1391
        %1904 = vmatprep.subr.bf16.mxu0 0
        %1905 = vmatpush2.bf16.msra.mxu0 %v1388
        %1906 = vmatprep.subr.bf16.mxu0 0
        %1907 = vmatpush2.bf16.msra.mxu0 %v1385
        %1908 = vmatprep.subr.bf16.mxu0 0
        %1909 = vmatpush2.bf16.msra.mxu0 %v1382
        %1910 = vmatprep.subr.bf16.mxu0 0
        %1911 = vmatpush2.bf16.msra.mxu0 %v1379
        %1912 = vmatprep.subr.bf16.mxu0 0
        %1913 = vmatpush2.bf16.msra.mxu0 %v1376
        %1914 = vmatprep.mubr.bf16.mxu0 %v603
        %1915 = vmatmul.mubr.bf16.gmra.mxu0 %v602
        %v1916 = vpop.f32.mrf.mxu0
        %v1917 = vadd.f32 %v1877, %v1916
        %v1918 = vpop.f32.mrf.mxu0
        %v1919 = vpop.f32.mrf.mxu0
        %v1920 = vpop.f32.mrf.mxu0
        %1921 = vdwg.mxu0
        %1922 = vmatprep.subr.bf16.mxu0 0
        %1923 = vmatpush1.bf16.msra.mxu0 %v1421
        %1924 = vmatprep.subr.bf16.mxu0 0
        %1925 = vmatpush1.bf16.msra.mxu0 %v1418
        %1926 = vmatprep.subr.bf16.mxu0 0
        %1927 = vmatpush1.bf16.msra.mxu0 %v1415
        %1928 = vmatprep.subr.bf16.mxu0 0
        %1929 = vmatpush1.bf16.msra.mxu0 %v1412
        %1930 = vmatprep.subr.bf16.mxu0 0
        %1931 = vmatpush1.bf16.msra.mxu0 %v1409
        %1932 = vmatprep.subr.bf16.mxu0 0
        %1933 = vmatpush1.bf16.msra.mxu0 %v1406
        %1934 = vmatprep.subr.bf16.mxu0 0
        %1935 = vmatpush1.bf16.msra.mxu0 %v1403
        %1936 = vmatprep.subr.bf16.mxu0 0
        %1937 = vmatpush1.bf16.msra.mxu0 %v1400
        %1938 = vmatprep.subr.bf16.mxu0 0
        %1939 = vmatpush2.bf16.msra.mxu0 %v1445
        %1940 = vmatprep.subr.bf16.mxu0 0
        %1941 = vmatpush2.bf16.msra.mxu0 %v1442
        %1942 = vmatprep.subr.bf16.mxu0 0
        %1943 = vmatpush2.bf16.msra.mxu0 %v1439
        %1944 = vmatprep.subr.bf16.mxu0 0
        %1945 = vmatpush2.bf16.msra.mxu0 %v1436
        %1946 = vmatprep.subr.bf16.mxu0 0
        %1947 = vmatpush2.bf16.msra.mxu0 %v1433
        %1948 = vmatprep.subr.bf16.mxu0 0
        %1949 = vmatpush2.bf16.msra.mxu0 %v1430
        %1950 = vmatprep.subr.bf16.mxu0 0
        %1951 = vmatpush2.bf16.msra.mxu0 %v1427
        %1952 = vmatprep.subr.bf16.mxu0 0
        %1953 = vmatpush2.bf16.msra.mxu0 %v1424
        %1954 = vmatprep.mubr.bf16.mxu0 %v605
        %1955 = vmatmul.mubr.bf16.gmra.mxu0 %v604
        %v1956 = vpop.f32.mrf.mxu0
        %v1957 = vadd.f32 %v1917, %v1956
        %v1958 = vpop.f32.mrf.mxu0
        %v1959 = vpop.f32.mrf.mxu0
        %v1960 = vpop.f32.mrf.mxu0
        %1961 = vdwg.mxu0
        %v1962 = vld [vmem:[#allocation2] sm:$0xff]
        %v1963 = vld [vmem:[#allocation2 + $0x8] sm:$0xff]
        %v1964 = vld [vmem:[#allocation2 + $0x10] sm:$0xff]
        %vm1965 = vcmp.gt.f32.partialorder %v1962, 1.0
        %vm1966 = vcmp.gt.f32.partialorder %v1963, 1.0
        %vm1967 = vcmp.gt.f32.partialorder %v1964, 1.0
        %v1968 = vsel %vm1965, 1, 0
        %v1969 = vsel %vm1966, 1, 0
        %v1970 = vsel %vm1967, 1, 0
        %v1971 = vcvt.s32.f32 %v1968
        %v1972 = vcvt.s32.f32 %v1969
        %v1973 = vcvt.s32.f32 %v1970
        %v1974 = vsub.f32 %v1796, %v1971
        %v1975 = vsub.f32 %v1798, %v1972
        %v1976 = vsub.f32 %v1957, %v1973
        %vm1977 = vcmp.gt.f32.partialorder %v1974, 1.0
        %vm1978 = vcmp.gt.f32.partialorder %v1975, 1.0
        %vm1979 = vcmp.gt.f32.partialorder %v1976, 1.0
        %1980 = vst [vmem:[#allocation2] sm:$0xff] %v1974
        %1981 = vst [vmem:[#allocation2 + $0x8] sm:$0xff] %v1975
        %1982 = vst [vmem:[#allocation2 + $0x10] sm:$0xff] %v1976
        %v1983 = vsel %vm1977, 1, 0
        %v1984 = vsel %vm1978, 1, 0
        %v1985 = vsel %vm1979, 1, 0
        %v1986 = vcvt.s32.f32 %v1983
        %v1987 = vcvt.s32.f32 %v1984
        %v1988 = vcvt.s32.f32 %v1985
        %v1989 = vpack.c.bf16 %v1986, %v1986
        %v1990 = vpack.c.bf16 %v1987, %v1987
        %v1991 = vpack.c.bf16 %v1988, %v1988
        %v1992 = vld [vmem:[#allocation10] sm:$0xf]
        %v1993 = vld [vmem:[#allocation10 + $0x4] sm:$0xf]
        %v1994 = vld [vmem:[#allocation10 + $0x8] sm:$0xf]
        %v1995 = vld [vmem:[#allocation10 + $0xc] sm:$0xf]
        %v1996 = vld [vmem:[#allocation10 + $0x10] sm:$0xf]
        %v1997 = vld [vmem:[#allocation10 + $0x14] sm:$0xf]
        %v1998 = vld [vmem:[#allocation10 + $0x18] sm:$0xf]
        %v1999 = vld [vmem:[#allocation10 + $0x1c] sm:$0xf]
        %v2000 = vld [vmem:[#allocation10 + $0x20] sm:$0xf]
        %v2001 = vld [vmem:[#allocation10 + $0x24] sm:$0xf]
        %v2002 = vld [vmem:[#allocation10 + $0x28] sm:$0xf]
        %v2003 = vld [vmem:[#allocation10 + $0x2c] sm:$0xf]
        %v2004 = vld [vmem:[#allocation10 + $0x30] sm:$0xf]
        %v2005 = vld [vmem:[#allocation10 + $0x34] sm:$0xf]
        %v2006 = vld [vmem:[#allocation10 + $0x38] sm:$0xf]
        %v2007 = vld [vmem:[#allocation10 + $0x3c] sm:$0xf]
        %v2008 = vld [vmem:[#allocation10 + $0x40] sm:$0xf]
        %v2009 = vld [vmem:[#allocation10 + $0x44] sm:$0xf]
        %v2010 = vld [vmem:[#allocation10 + $0x48] sm:$0xf]
        %v2011 = vld [vmem:[#allocation10 + $0x4c] sm:$0xf]
        %v2012 = vld [vmem:[#allocation10 + $0x50] sm:$0xf]
        %v2013 = vld [vmem:[#allocation10 + $0x54] sm:$0xf]
        %v2014 = vld [vmem:[#allocation10 + $0x58] sm:$0xf]
        %v2015 = vld [vmem:[#allocation10 + $0x5c] sm:$0xf]
        %v2016 = vld [vmem:[#allocation10 + $0x60] sm:$0xf]
        %v2017 = vld [vmem:[#allocation10 + $0x64] sm:$0xf]
        %v2018 = vld [vmem:[#allocation10 + $0x68] sm:$0xf]
        %v2019 = vld [vmem:[#allocation10 + $0x6c] sm:$0xf]
        %v2020 = vld [vmem:[#allocation10 + $0x70] sm:$0xf]
        %v2021 = vld [vmem:[#allocation10 + $0x74] sm:$0xf]
        %v2022 = vld [vmem:[#allocation10 + $0x78] sm:$0xf]
        %v2023 = vld [vmem:[#allocation10 + $0x7c] sm:$0xf]
        %v2024 = vld [vmem:[#allocation10 + $0x80] sm:$0xf]
        %v2025 = vld [vmem:[#allocation10 + $0x84] sm:$0xf]
        %v2026 = vld [vmem:[#allocation10 + $0x88] sm:$0xf]
        %v2027 = vld [vmem:[#allocation10 + $0x8c] sm:$0xf]
        %v2028 = vld [vmem:[#allocation10 + $0x90] sm:$0xf]
        %v2029 = vld [vmem:[#allocation10 + $0x94] sm:$0xf]
        %v2030 = vld [vmem:[#allocation10 + $0x98] sm:$0xf]
        %v2031 = vld [vmem:[#allocation10 + $0x9c] sm:$0xf]
        %v2032 = vld [vmem:[#allocation10 + $0xa0] sm:$0xf]
        %v2033 = vld [vmem:[#allocation10 + $0xa4] sm:$0xf]
        %v2034 = vld [vmem:[#allocation10 + $0xa8] sm:$0xf]
        %v2035 = vld [vmem:[#allocation10 + $0xac] sm:$0xf]
        %v2036 = vld [vmem:[#allocation10 + $0xb0] sm:$0xf]
        %v2037 = vld [vmem:[#allocation10 + $0xb4] sm:$0xf]
        %v2038 = vld [vmem:[#allocation10 + $0xb8] sm:$0xf]
        %v2039 = vld [vmem:[#allocation10 + $0xbc] sm:$0xf]
        %v2088 = vunpack.c.l.b16 %v1992
        %v2089 = vunpack.c.l.b16 %v1993
        %v2090 = vunpack.c.l.b16 %v1994
        %v2091 = vunpack.c.l.b16 %v1995
        %v2092 = vunpack.c.l.b16 %v1996
        %v2093 = vunpack.c.l.b16 %v1997
        %v2094 = vunpack.c.l.b16 %v1998
        %v2095 = vunpack.c.l.b16 %v1999
        %v2096 = vunpack.c.l.b16 %v2000
        %v2097 = vunpack.c.l.b16 %v2001
        %v2098 = vunpack.c.l.b16 %v2002
        %v2099 = vunpack.c.l.b16 %v2003
        %v2100 = vunpack.c.l.b16 %v2004
        %v2101 = vunpack.c.l.b16 %v2005
        %v2102 = vunpack.c.l.b16 %v2006
        %v2103 = vunpack.c.l.b16 %v2007
        %v2104 = vunpack.c.l.b16 %v2008
        %v2105 = vunpack.c.l.b16 %v2009
        %v2106 = vunpack.c.l.b16 %v2010
        %v2107 = vunpack.c.l.b16 %v2011
        %v2108 = vunpack.c.l.b16 %v2012
        %v2109 = vunpack.c.l.b16 %v2013
        %v2110 = vunpack.c.l.b16 %v2014
        %v2111 = vunpack.c.l.b16 %v2015
        %v2112 = vunpack.c.l.b16 %v2016
        %v2113 = vunpack.c.l.b16 %v2017
        %v2114 = vunpack.c.l.b16 %v2018
        %v2115 = vunpack.c.l.b16 %v2019
        %v2116 = vunpack.c.l.b16 %v2020
        %v2117 = vunpack.c.l.b16 %v2021
        %v2118 = vunpack.c.l.b16 %v2022
        %v2119 = vunpack.c.l.b16 %v2023
        %v2120 = vunpack.c.l.b16 %v2024
        %v2121 = vunpack.c.l.b16 %v2025
        %v2122 = vunpack.c.l.b16 %v2026
        %v2123 = vunpack.c.l.b16 %v2027
        %v2124 = vunpack.c.l.b16 %v2028
        %v2125 = vunpack.c.l.b16 %v2029
        %v2126 = vunpack.c.l.b16 %v2030
        %v2127 = vunpack.c.l.b16 %v2031
        %v2128 = vunpack.c.l.b16 %v2032
        %v2129 = vunpack.c.l.b16 %v2033
        %v2130 = vunpack.c.l.b16 %v2034
        %v2131 = vunpack.c.l.b16 %v2035
        %v2132 = vunpack.c.l.b16 %v2036
        %v2133 = vunpack.c.l.b16 %v2037
        %v2134 = vunpack.c.l.b16 %v2038
        %v2135 = vunpack.c.l.b16 %v2039
        %v2136 = vpack.c.b16 %v2089, %v2088
        %v2137 = vpack.c.b16 %v2091, %v2090
        %v2138 = vpack.c.b16 %v2093, %v2092
        %v2139 = vpack.c.b16 %v2095, %v2094
        %v2140 = vpack.c.b16 %v2097, %v2096
        %v2141 = vpack.c.b16 %v2099, %v2098
        %v2142 = vpack.c.b16 %v2101, %v2100
        %v2143 = vpack.c.b16 %v2103, %v2102
        %v2144 = vpack.c.b16 %v2105, %v2104
        %v2145 = vpack.c.b16 %v2107, %v2106
        %v2146 = vpack.c.b16 %v2109, %v2108
        %v2147 = vpack.c.b16 %v2111, %v2110
        %v2148 = vpack.c.b16 %v2113, %v2112
        %v2149 = vpack.c.b16 %v2115, %v2114
        %v2150 = vpack.c.b16 %v2117, %v2116
        %v2151 = vpack.c.b16 %v2119, %v2118
        %v2152 = vpack.c.b16 %v2121, %v2120
        %v2153 = vpack.c.b16 %v2123, %v2122
        %v2154 = vpack.c.b16 %v2125, %v2124
        %v2155 = vpack.c.b16 %v2127, %v2126
        %v2156 = vpack.c.b16 %v2129, %v2128
        %v2157 = vpack.c.b16 %v2131, %v2130
        %v2158 = vpack.c.b16 %v2133, %v2132
        %v2159 = vpack.c.b16 %v2135, %v2134
        %2184 = vmatprep.subr.bf16.mxu0 0
        %2185 = vmatpush1.bf16.msra.mxu0 %v2143
        %2186 = vmatprep.subr.bf16.mxu0 0
        %2187 = vmatpush1.bf16.msra.mxu0 %v2142
        %2188 = vmatprep.subr.bf16.mxu0 0
        %2189 = vmatpush1.bf16.msra.mxu0 %v2141
        %2190 = vmatprep.subr.bf16.mxu0 0
        %2191 = vmatpush1.bf16.msra.mxu0 %v2140
        %2192 = vmatprep.subr.bf16.mxu0 0
        %2193 = vmatpush1.bf16.msra.mxu0 %v2139
        %2194 = vmatprep.subr.bf16.mxu0 0
        %2195 = vmatpush1.bf16.msra.mxu0 %v2138
        %2196 = vmatprep.subr.bf16.mxu0 0
        %2197 = vmatpush1.bf16.msra.mxu0 %v2137
        %2198 = vmatprep.subr.bf16.mxu0 0
        %2199 = vmatpush1.bf16.msra.mxu0 %v2136
        %2200 = vmatprep.subr.bf16.mxu0 0
        %2201 = vmatpush2.bf16.msra.mxu0 %v2151
        %2202 = vmatprep.subr.bf16.mxu0 0
        %2203 = vmatpush2.bf16.msra.mxu0 %v2150
        %2204 = vmatprep.subr.bf16.mxu0 0
        %2205 = vmatpush2.bf16.msra.mxu0 %v2149
        %2206 = vmatprep.subr.bf16.mxu0 0
        %2207 = vmatpush2.bf16.msra.mxu0 %v2148
        %2208 = vmatprep.subr.bf16.mxu0 0
        %2209 = vmatpush2.bf16.msra.mxu0 %v2147
        %2210 = vmatprep.subr.bf16.mxu0 0
        %2211 = vmatpush2.bf16.msra.mxu0 %v2146
        %2212 = vmatprep.subr.bf16.mxu0 0
        %2213 = vmatpush2.bf16.msra.mxu0 %v2145
        %2214 = vmatprep.subr.bf16.mxu0 0
        %2215 = vmatpush2.bf16.msra.mxu0 %v2144
        %2216 = vmatprep.mubr.bf16.mxu0 %v1990
        %2217 = vmatmul.mubr.bf16.gmra.mxu0 %v1989
        %v2218 = vpop.f32.mrf.mxu0
        %v2219 = vadd.f32 0.0, %v2218
        %v2220 = vpop.f32.mrf.mxu0
        %v2221 = vpop.f32.mrf.mxu0
        %v2222 = vpop.f32.mrf.mxu0
        %2223 = vdwg.mxu0
        %2224 = vmatprep.subr.bf16.mxu0 0
        %2225 = vmatpush1.bf16.msra.mxu0 %v2159
        %2226 = vmatprep.subr.bf16.mxu0 0
        %2227 = vmatpush1.bf16.msra.mxu0 %v2158
        %2228 = vmatprep.subr.bf16.mxu0 0
        %2229 = vmatpush1.bf16.msra.mxu0 %v2157
        %2230 = vmatprep.subr.bf16.mxu0 0
        %2231 = vmatpush1.bf16.msra.mxu0 %v2156
        %2232 = vmatprep.subr.bf16.mxu0 0
        %2233 = vmatpush1.bf16.msra.mxu0 %v2155
        %2234 = vmatprep.subr.bf16.mxu0 0
        %2235 = vmatpush1.bf16.msra.mxu0 %v2154
        %2236 = vmatprep.subr.bf16.mxu0 0
        %2237 = vmatpush1.bf16.msra.mxu0 %v2153
        %2238 = vmatprep.subr.bf16.mxu0 0
        %2239 = vmatpush1.bf16.msra.mxu0 %v2152
        %2240 = vmatprep.subr.bf16.mxu0 0
        %2241 = vmatpush2.bf16.msra.mxu0 0
        %2242 = vmatprep.subr.bf16.mxu0 0
        %2243 = vmatpush2.bf16.msra.mxu0 0
        %2244 = vmatprep.subr.bf16.mxu0 0
        %2245 = vmatpush2.bf16.msra.mxu0 0
        %2246 = vmatprep.subr.bf16.mxu0 0
        %2247 = vmatpush2.bf16.msra.mxu0 0
        %2248 = vmatprep.subr.bf16.mxu0 0
        %2249 = vmatpush2.bf16.msra.mxu0 0
        %2250 = vmatprep.subr.bf16.mxu0 0
        %2251 = vmatpush2.bf16.msra.mxu0 0
        %2252 = vmatprep.subr.bf16.mxu0 0
        %2253 = vmatpush2.bf16.msra.mxu0 0
        %2254 = vmatprep.subr.bf16.mxu0 0
        %2255 = vmatpush2.bf16.msra.mxu0 0
        %2256 = vmatprep.mubr.bf16.mxu0 0
        %2257 = vmatmul.mubr.bf16.gmra.mxu0 %v1991
        %v2258 = vpop.f32.mrf.mxu0
        %v2259 = vadd.f32 %v2219, %v2258
        %v2260 = vpop.f32.mrf.mxu0
        %v2261 = vpop.f32.mrf.mxu0
        %v2262 = vpop.f32.mrf.mxu0
        %2263 = vdwg.mxu0
        %v2264 = vld [vmem:[#allocation3] sm:$0xff]
        %vm2265 = vcmp.gt.f32.partialorder %v2264, 1.0
        %v2266 = vsel %vm2265, 1, 0
        %v2267 = vcvt.s32.f32 %v2266
        %v2268 = vsub.f32 %v2259, %v2267
        %vm2269 = vcmp.gt.f32.partialorder %v2268, 1.0
        %2270 = vst [vmem:[#allocation3] sm:$0xff] %v2268
        %v2271 = vsel %vm2269, 1, 0
        %v2272 = vcvt.s32.f32 %v2271
        %v2273 = vpack.c.bf16 %v2272, %v2272
        %v2274 = vld [vmem:[#allocation11] sm:$0xf]
        %v2275 = vld [vmem:[#allocation11 + $0x4] sm:$0xf]
        %v2276 = vld [vmem:[#allocation11 + $0x8] sm:$0xf]
        %v2277 = vld [vmem:[#allocation11 + $0xc] sm:$0xf]
        %v2278 = vld [vmem:[#allocation11 + $0x10] sm:$0xf]
        %v2279 = vld [vmem:[#allocation11 + $0x14] sm:$0xf]
        %v2280 = vld [vmem:[#allocation11 + $0x18] sm:$0xf]
        %v2281 = vld [vmem:[#allocation11 + $0x1c] sm:$0xf]
        %v2282 = vld [vmem:[#allocation11 + $0x20] sm:$0xf]
        %v2283 = vld [vmem:[#allocation11 + $0x24] sm:$0xf]
        %v2284 = vld [vmem:[#allocation11 + $0x28] sm:$0xf]
        %v2285 = vld [vmem:[#allocation11 + $0x2c] sm:$0xf]
        %v2286 = vld [vmem:[#allocation11 + $0x30] sm:$0xf]
        %v2287 = vld [vmem:[#allocation11 + $0x34] sm:$0xf]
        %v2288 = vld [vmem:[#allocation11 + $0x38] sm:$0xf]
        %v2289 = vld [vmem:[#allocation11 + $0x3c] sm:$0xf]
        %v2306 = vunpack.c.l.b16 %v2274
        %v2307 = vunpack.c.l.b16 %v2275
        %v2308 = vunpack.c.l.b16 %v2276
        %v2309 = vunpack.c.l.b16 %v2277
        %v2310 = vunpack.c.l.b16 %v2278
        %v2311 = vunpack.c.l.b16 %v2279
        %v2312 = vunpack.c.l.b16 %v2280
        %v2313 = vunpack.c.l.b16 %v2281
        %v2314 = vunpack.c.l.b16 %v2282
        %v2315 = vunpack.c.l.b16 %v2283
        %v2316 = vunpack.c.l.b16 %v2284
        %v2317 = vunpack.c.l.b16 %v2285
        %v2318 = vunpack.c.l.b16 %v2286
        %v2319 = vunpack.c.l.b16 %v2287
        %v2320 = vunpack.c.l.b16 %v2288
        %v2321 = vunpack.c.l.b16 %v2289
        %v2322 = vpack.c.b16 %v2307, %v2306
        %v2323 = vpack.c.b16 %v2309, %v2308
        %v2324 = vpack.c.b16 %v2311, %v2310
        %v2325 = vpack.c.b16 %v2313, %v2312
        %v2326 = vpack.c.b16 %v2315, %v2314
        %v2327 = vpack.c.b16 %v2317, %v2316
        %v2328 = vpack.c.b16 %v2319, %v2318
        %v2329 = vpack.c.b16 %v2321, %v2320
        %2338 = vmatprep.subr.bf16.mxu0 0
        %2339 = vmatpush1.bf16.msra.mxu0 %v2329
        %2340 = vmatprep.subr.bf16.mxu0 0
        %2341 = vmatpush1.bf16.msra.mxu0 %v2328
        %2342 = vmatprep.subr.bf16.mxu0 0
        %2343 = vmatpush1.bf16.msra.mxu0 %v2327
        %2344 = vmatprep.subr.bf16.mxu0 0
        %2345 = vmatpush1.bf16.msra.mxu0 %v2326
        %2346 = vmatprep.subr.bf16.mxu0 0
        %2347 = vmatpush1.bf16.msra.mxu0 %v2325
        %2348 = vmatprep.subr.bf16.mxu0 0
        %2349 = vmatpush1.bf16.msra.mxu0 %v2324
        %2350 = vmatprep.subr.bf16.mxu0 0
        %2351 = vmatpush1.bf16.msra.mxu0 %v2323
        %2352 = vmatprep.subr.bf16.mxu0 0
        %2353 = vmatpush1.bf16.msra.mxu0 %v2322
        %2354 = vmatprep.subr.bf16.mxu0 0
        %2355 = vmatpush2.bf16.msra.mxu0 0
        %2356 = vmatprep.subr.bf16.mxu0 0
        %2357 = vmatpush2.bf16.msra.mxu0 0
        %2358 = vmatprep.subr.bf16.mxu0 0
        %2359 = vmatpush2.bf16.msra.mxu0 0
        %2360 = vmatprep.subr.bf16.mxu0 0
        %2361 = vmatpush2.bf16.msra.mxu0 0
        %2362 = vmatprep.subr.bf16.mxu0 0
        %2363 = vmatpush2.bf16.msra.mxu0 0
        %2364 = vmatprep.subr.bf16.mxu0 0
        %2365 = vmatpush2.bf16.msra.mxu0 0
        %2366 = vmatprep.subr.bf16.mxu0 0
        %2367 = vmatpush2.bf16.msra.mxu0 0
        %2368 = vmatprep.subr.bf16.mxu0 0
        %2369 = vmatpush2.bf16.msra.mxu0 0
        %2370 = vmatprep.mubr.bf16.mxu0 0
        %2371 = vmatmul.mubr.bf16.gmra.mxu0 %v2273
        %v2372 = vpop.f32.mrf.mxu0
        %v2373 = vadd.f32 0.0, %v2372
        %v2374 = vpop.f32.mrf.mxu0
        %v2375 = vpop.f32.mrf.mxu0
        %v2376 = vpop.f32.mrf.mxu0
        %2377 = vdwg.mxu0
        %v2378 = vld [vmem:[#allocation4] sm:$0xff]
        %vm2379 = vcmp.gt.f32.partialorder %v2378, 1.0
        %v2380 = vsel %vm2379, 1, 0
        %v2381 = vcvt.s32.f32 %v2380
        %v2382 = vsub.f32 %v2373, %v2381
        %vm2383 = vcmp.gt.f32.partialorder %v2382, 1.0
        %v2384 = vsel %vm2383, 1, 0
        %v2385 = vcvt.s32.f32 %v2384
        %2386 = vst [vmem:[#allocation4] sm:$0xff] %v2382
        %2387 = vst [vmem:[%s308] sm:$0xff] %v2385
        %2388 = vst [vmem:[%s315] sm:$0xff] %v2382
        %s2389 = sand.u32 %s141, 1
        %s2390 = scalar_lea.sflag [#allocation7], %s2389
        %s2391 = sand.u32 %s141, 1
        %s2392 = smul.addr %s2391, 8
        %s2393 = scalar_lea.vmem [#allocation13], %s2392
        %s2394 = sand.u32 %s169, 1
        %s2395 = scalar_lea.sflag [#allocation15], %s2394
        %s2396 = sand.u32 %s169, 1
        %s2397 = smul.addr %s2396, 8
        %s2398 = scalar_lea.vmem [#allocation14], %s2397
        // Predicated region
        $region57: #{tpu_custom_call.1} parent=35 // pred_check
          %p2399 = pneg %p151
        $region58: #{tpu_custom_call.1} parent=35 // pred_check_branch
          %2401 = sbr.rel (%p2399) target = $region60
        $region59: #{tpu_custom_call.1} parent=35 // pred_region
          %s2403 = ssub.s32 128, 128
          %2404 = vsyncadd %s2390, %s2403
          %s2405 = sadd.s32 %s32, %s33
          %s2406 = smul.addr %s2405, 128
          %s2407 = scalar_lea.hbm %s4, %s2406
          %s2409 = sshll.u32 %s2393, 4
          %s2410 = int_to_ptr.vmem [resolvable:$true] %s2409
          %2412 = dma.vmem_to_hbm [thread:$0]  %s2410, 128, %s2407, %s2390
        $region60: #{tpu_custom_call.1} parent=35 // pred_fallthru
          _
        // Predicated region
        $region61: #{tpu_custom_call.1} parent=35 // pred_check
          %p2413 = pneg %p179
        $region62: #{tpu_custom_call.1} parent=35 // pred_check_branch
          %2415 = sbr.rel (%p2413) target = $region64
        $region63: #{tpu_custom_call.1} parent=35 // pred_region
          %s2417 = ssub.s32 128, 128
          %2418 = vsyncadd %s2395, %s2417
          %s2419 = sadd.s32 %s32, %s33
          %s2420 = smul.addr %s2419, 128
          %s2421 = scalar_lea.hbm %s5, %s2420
          %s2423 = sshll.u32 %s2398, 4
          %s2424 = int_to_ptr.vmem [resolvable:$true] %s2423
          %2426 = dma.vmem_to_hbm [thread:$0]  %s2424, 128, %s2421, %s2395
        $region64: #{tpu_custom_call.1} parent=35 // pred_fallthru
          _
      $region36: #{tpu_custom_call.1} parent=5 // pred_fallthru
        _
      %p2427 = scmp.le.s32.totalorder 2, %s23
      // Predicated region
      $region65: #{tpu_custom_call.1} parent=5 // pred_check
        %p2428 = pneg %p2427
      $region66: #{tpu_custom_call.1} parent=5 // pred_check_branch
        %2430 = sbr.rel (%p2428) target = $region68
      $region67: #{tpu_custom_call.1} parent=5 // pred_region
        %s2431 = ssub.s32 %s23, 2
        // Predicated region
        $region69: #{tpu_custom_call.1} parent=67 // pred_check
          %p2432 = pneg %p157
        $region70: #{tpu_custom_call.1} parent=67 // pred_check_branch
          %2434 = sbr.rel (%p2432) target = $region72
        $region71: #{tpu_custom_call.1} parent=67 // pred_region
          %s2435 = sand.u32 %s142, 1
          %s2436 = scalar_lea.sflag [#allocation7], %s2435
          %s2437 = sand.u32 %s142, 1
          %s2438 = smul.addr %s2437, 8
          %s2439 = scalar_lea.vmem [#allocation13], %s2438
          %2440 = dma.done %s2436, 128
        $region72: #{tpu_custom_call.1} parent=67 // pred_fallthru
          _
        // Predicated region
        $region73: #{tpu_custom_call.1} parent=67 // pred_check
          %p2441 = pneg %p185
        $region74: #{tpu_custom_call.1} parent=67 // pred_check_branch
          %2443 = sbr.rel (%p2441) target = $region76
        $region75: #{tpu_custom_call.1} parent=67 // pred_region
          %s2444 = sand.u32 %s170, 1
          %s2445 = scalar_lea.sflag [#allocation15], %s2444
          %s2446 = sand.u32 %s170, 1
          %s2447 = smul.addr %s2446, 8
          %s2448 = scalar_lea.vmem [#allocation14], %s2447
          %2449 = dma.done %s2445, 128
        $region76: #{tpu_custom_call.1} parent=67 // pred_fallthru
          _
      $region68: #{tpu_custom_call.1} parent=5 // pred_fallthru
        _
    $region6: #{tpu_custom_call.1} parent=1 // loop_footer
      %s27 = sadd.s32 1, %s23
    $region7: #{tpu_custom_call.1} parent=1 // loop_footer_branch
      %22 = sbr.rel target = $region3
    $region8: #{tpu_custom_call.1} parent=1 // loop_exit
      _
    %2450 = vsyncpa [#allocation6], 1
    %s2451 = scalar_lea.sflag [#allocation6], 1
    %2452 = vsyncpa %s2451, 1
    %2453 = vsyncpa [#allocation9], 1
    %2454 = vsyncpa [#allocation12], 1
    %2455 = vsyncpa [#allocation7], 1
    %s2456 = scalar_lea.sflag [#allocation7], 1
    %2457 = vsyncpa %s2456, 1
    %2458 = vsyncpa [#allocation15], 1
    %s2459 = scalar_lea.sflag [#allocation15], 1
    %2460 = vsyncpa %s2459, 1

</llo_original>
